<compile_context>
chip_gen: v7x
topology: tpu7x:2x2x1
jax: 0.10.0
libtpu: 0.0.40
codegen_flags: <defaults>
</compile_context>

<pallas_src>
import functools

import jax
import jax.numpy as jnp
from jax.experimental import pallas as pl
from jax.experimental.pallas import tpu as pltpu


def _round_up(a, b):
    return -(-a // b) * b


def _num_parallel_cores():
    """Best-effort count of TensorCores a 'parallel' grid axis can be sharded over."""
    try:
        kind = jax.devices()[0].device_kind.lower()
    except Exception:
        return 1
    if "v7" in kind or "7x" in kind:
        return 2                      # v7x: 2 TensorCores per chip
    if "v4" in kind:
        return 2                      # v4 megacore
    if "v5" in kind and "lite" not in kind and "v5e" not in kind:
        return 2                      # v5p megacore
    return 1                          # v5e / v6e: single TensorCore


def _swish_gate_kernel(x_ref, red_ref, exp_ref, o_ref, *, inv_hw, split_f32):
    """One (rows, Cg*HW) lane-dense block.

    Per row (= one batch sample x one group of Cg channels):
      m     = per-channel mean over the 5x5 window   (MXU segment-sum)
      gate  = m * sigmoid(m)                          (VPU/EUP)
      out   = x * gate broadcast over the window      (MXU segment-expand)
    red/exp are constant 0/1 block-diagonal matrices, so both matmuls are
    exact selections/sums; for f32 inputs the non-constant operand is split
    into hi/lo bf16 parts so the result is f32-accurate regardless of the
    MXU's f32 pass configuration.
    """
    x = x_ref[...]                                     # (rt, LG), input dtype
    red = red_ref[...]                                 # (LG, Cg), 0/1
    exp = exp_ref[...]                                 # (Cg, LG), 0/1

    if split_f32:
        x_hi = x.astype(jnp.bfloat16).astype(jnp.float32)
        x_lo = x - x_hi
        s = (jnp.dot(x_hi, red, preferred_element_type=jnp.float32)
             + jnp.dot(x_lo, red, preferred_element_type=jnp.float32))
    else:
        s = jnp.dot(x, red, preferred_element_type=jnp.float32)

    m = s * inv_hw                                     # v2: (rt, Cg) f32
    gate = m * jax.nn.sigmoid(m)                       # v4 = v2 * sigmoid(v2)

    if split_f32:
        g_hi = gate.astype(jnp.bfloat16).astype(jnp.float32)
        g_lo = gate - g_hi
        scale = (jnp.dot(g_hi, exp, preferred_element_type=jnp.float32)
                 + jnp.dot(g_lo, exp, preferred_element_type=jnp.float32))
    else:
        scale = jnp.dot(gate.astype(exp.dtype), exp,
                        preferred_element_type=jnp.float32)

    o_ref[...] = (x * scale.astype(x.dtype)).astype(o_ref.dtype)      # v5


def model_forward(x_nchw):
    """Forward pass of the module for NCHW input with H == W == 5."""
    B, C, H, W = x_nchw.shape
    if (H, W) != (5, 5):
        # The module's reshape to (B, C, 1, 1) is only legal when the pooled
        # output is 1x1, i.e. the input spatial extent equals the 5x5 kernel.
        raise ValueError("Model.forward requires 5x5 spatial inputs.")
    HW = H * W
    dt = x_nchw.dtype
    itemsize = jnp.dtype(dt).itemsize
    sub = max(8, 32 // itemsize)          # sublane tile: 8 (f32) / 16 (bf16)

    # Channel group per flat row: largest divisor of C <= 64 keeps the
    # block-diagonal matrices tiny while the lane dim (Cg*25) stays ~dense.
    Cg = max(d for d in range(1, min(C, 64) + 1) if C % d == 0)
    LG = Cg * HW                          # lanes per row
    R = B * (C // Cg)                     # rows of the flat view

    # Free, contiguous reshape of NCHW: one row = (batch, channel-group).
    x_flat = x_nchw.reshape(R, LG)

    # Constant 0/1 block-diagonal matrices (computed by XLA, DMA'd once).
    lane_ch = jax.lax.broadcasted_iota(jnp.int32, (LG, Cg), 0) // HW
    col = jax.lax.broadcasted_iota(jnp.int32, (LG, Cg), 1)
    red_mat = (lane_ch == col).astype(dt)                 # (LG, Cg) segment-sum
    row = jax.lax.broadcasted_iota(jnp.int32, (Cg, LG), 0)
    lane_ch2 = jax.lax.broadcasted_iota(jnp.int32, (Cg, LG), 1) // HW
    exp_mat = (row == lane_ch2).astype(dt)                # (Cg, LG) segment-expand

    # Padded-VMEM-aware row-tile budget (lane dim pads to 128, rows to `sub`).
    lanes_pad = _round_up(LG, 128)
    row_io_bytes = lanes_pad * itemsize
    per_row_bytes = 4 * row_io_bytes + 3 * lanes_pad * 4  # 2x in + 2x out bufs + f32 temps
    mat_bytes = (_round_up(LG, sub) * _round_up(Cg, 128)
                 + _round_up(Cg, sub) * lanes_pad) * itemsize
    budget = 20 * 1024 * 1024 - 2 * mat_bytes
    rt_cap = max(sub, (max(budget, 0) // per_row_bytes) // sub * sub)

    # Generation-aware grid: 1 step on single-TC chips (v5e/v6e), a balanced
    # 2-way split on multi-core chips (v7x / megacore), more steps only if a
    # block would not fit the padded-VMEM budget.
    want_steps = 2 if (_num_parallel_cores() >= 2 and R >= 2 * sub) else 1
    rt = min(_round_up(pl.cdiv(R, want_steps), sub), rt_cap)
    if rt >= R:
        rt = R                              # full extent is always legal
    steps = pl.cdiv(R, rt)

    kernel = functools.partial(_swish_gate_kernel, inv_hw=1.0 / HW,
                               split_f32=(dt == jnp.float32))

    out_flat = pl.pallas_call(
        kernel,
        out_shape=jax.ShapeDtypeStruct((R, LG), dt),
        grid_spec=pltpu.PrefetchScalarGridSpec(
            num_scalar_prefetch=0,
            grid=(steps,),
            in_specs=[
                pl.BlockSpec((rt, LG), lambda i: (i, 0)),   # x rows, lane-dense
                pl.BlockSpec((LG, Cg), lambda i: (0, 0)),   # reduce matrix (fetched once)
                pl.BlockSpec((Cg, LG), lambda i: (0, 0)),   # expand matrix (fetched once)
            ],
            out_specs=pl.BlockSpec((rt, LG), lambda i: (i, 0)),
        ),
        compiler_params=pltpu.CompilerParams(
            dimension_semantics=("parallel",),
            vmem_limit_bytes=32 * 1024 * 1024,
        ),
    )(x_flat, red_mat, exp_mat)

    # Free contiguous reshape back to NCHW.
    return out_flat.reshape(B, C, H, W)


def _reference(x_nchw):
    m = jnp.mean(x_nchw.astype(jnp.float32), axis=(2, 3), keepdims=True)   # v1/v2
    v4 = m * jax.nn.sigmoid(m)                                             # v3, v4
    return (x_nchw.astype(jnp.float32) * v4).astype(x_nchw.dtype)          # v5


if __name__ == "__main__":
    fwd = jax.jit(model_forward)

    # Small shape consistent with the module (spatial must be 5x5 so that
    # AvgPool2d((5,5), stride=1, pad=0) -> 1x1 makes the reshape legal).
    x = jax.random.normal(jax.random.PRNGKey(0), (2, 128, 5, 5), dtype=jnp.float32)
    out = jax.block_until_ready(fwd(x))
    assert out.shape == x.shape
    assert jnp.allclose(out, _reference(x), atol=1e-4, rtol=1e-4)

    # Spec-scale batch/channels (H=W=5 keeps the module's reshape valid);
    # exercises the multi-row grid (balanced 2-way split on multi-core chips).
    x2 = jax.random.normal(jax.random.PRNGKey(1), (16, 256, 5, 5), dtype=jnp.float32)
    out2 = jax.block_until_ready(fwd(x2))
    assert out2.shape == x2.shape
    assert jnp.allclose(out2, _reference(x2), atol=1e-4, rtol=1e-4)

    # bf16: gate broadcast / final multiply carry a few bf16 ULPs of error.
    x3 = jax.random.normal(jax.random.PRNGKey(2), (4, 64, 5, 5), dtype=jnp.bfloat16)
    out3 = jax.block_until_ready(fwd(x3))
    assert out3.shape == x3.shape
    assert jnp.allclose(out3.astype(jnp.float32), _reference(x3).astype(jnp.float32),
                        atol=2e-2, rtol=2e-2)

    print("KERNEL_OK")
</pallas_src>

<mosaic_0001>
module attributes {stable_mosaic.version = 11 : i64} {
  func.func @_swish_gate_kernel(%arg0: i32, %arg1: memref<4x1600xf32, #tpu.memory_space<vmem>>, %arg2: memref<1600x64xf32, #tpu.memory_space<vmem>>, %arg3: memref<64x1600xf32, #tpu.memory_space<vmem>>, %arg4: memref<4x1600xf32, #tpu.memory_space<vmem>>) attributes {dimension_semantics = [#tpu.dimension_semantics<parallel>], iteration_bounds = array<i64: 1>, scalar_prefetch = 0 : i64, scratch_operands = 0 : i64, tpu.core_type = #tpu.core_type<tc>, window_params = [{transform_indices = @transform_0, window_bounds = array<i64: 4, 1600>}, {pipeline_mode = #tpu.pipeline_mode<synchronous>, transform_indices = @transform_1, window_bounds = array<i64: 1600, 64>}, {pipeline_mode = #tpu.pipeline_mode<synchronous>, transform_indices = @transform_2, window_bounds = array<i64: 64, 1600>}, {transform_indices = @transform_3, window_bounds = array<i64: 4, 1600>}]} {
    %c0 = arith.constant 0 : index
    %c0_0 = arith.constant 0 : index
    %0 = vector.load %arg1[%c0, %c0_0] : memref<4x1600xf32, #tpu.memory_space<vmem>>, vector<4x1600xf32>
    %c0_1 = arith.constant 0 : index
    %c0_2 = arith.constant 0 : index
    %1 = vector.load %arg2[%c0_1, %c0_2] : memref<1600x64xf32, #tpu.memory_space<vmem>>, vector<1600x64xf32>
    %c0_3 = arith.constant 0 : index
    %c0_4 = arith.constant 0 : index
    %2 = vector.load %arg3[%c0_3, %c0_4] : memref<64x1600xf32, #tpu.memory_space<vmem>>, vector<64x1600xf32>
    %3 = arith.truncf %0 : vector<4x1600xf32> to vector<4x1600xbf16>
    %4 = arith.extf %3 : vector<4x1600xbf16> to vector<4x1600xf32>
    %5 = arith.subf %0, %4 : vector<4x1600xf32>
    %cst = arith.constant dense<0.000000e+00> : vector<4x64xf32>
    %6 = tpu.matmul %4, %1, %cst {dimension_numbers = #tpu.dot_dimension_numbers<[1], [0], [0], [1], [0, 0, 1, 1], [], []>} : vector<4x1600xf32>, vector<1600x64xf32>, vector<4x64xf32> -> vector<4x64xf32>
    %cst_5 = arith.constant dense<0.000000e+00> : vector<4x64xf32>
    %7 = tpu.matmul %5, %1, %cst_5 {dimension_numbers = #tpu.dot_dimension_numbers<[1], [0], [0], [1], [0, 0, 1, 1], [], []>} : vector<4x1600xf32>, vector<1600x64xf32>, vector<4x64xf32> -> vector<4x64xf32>
    %8 = arith.addf %6, %7 : vector<4x64xf32>
    %cst_6 = arith.constant 4.000000e-02 : f32
    %9 = vector.broadcast %cst_6 : f32 to vector<4x64xf32>
    %10 = arith.mulf %8, %9 : vector<4x64xf32>
    %11 = arith.negf %10 : vector<4x64xf32>
    %12 = math.exp %11 : vector<4x64xf32>
    %cst_7 = arith.constant 1.000000e+00 : f32
    %13 = vector.broadcast %cst_7 : f32 to vector<4x64xf32>
    %14 = arith.addf %13, %12 : vector<4x64xf32>
    %15 = arith.divf %13, %14 : vector<4x64xf32>
    %16 = arith.mulf %10, %15 : vector<4x64xf32>
    %17 = arith.truncf %16 : vector<4x64xf32> to vector<4x64xbf16>
    %18 = arith.extf %17 : vector<4x64xbf16> to vector<4x64xf32>
    %19 = arith.subf %16, %18 : vector<4x64xf32>
    %cst_8 = arith.constant dense<0.000000e+00> : vector<4x1600xf32>
    %20 = tpu.matmul %18, %2, %cst_8 {dimension_numbers = #tpu.dot_dimension_numbers<[1], [0], [0], [1], [0, 0, 1, 1], [], []>} : vector<4x64xf32>, vector<64x1600xf32>, vector<4x1600xf32> -> vector<4x1600xf32>
    %cst_9 = arith.constant dense<0.000000e+00> : vector<4x1600xf32>
    %21 = tpu.matmul %19, %2, %cst_9 {dimension_numbers = #tpu.dot_dimension_numbers<[1], [0], [0], [1], [0, 0, 1, 1], [], []>} : vector<4x64xf32>, vector<64x1600xf32>, vector<4x1600xf32> -> vector<4x1600xf32>
    %22 = arith.addf %20, %21 : vector<4x1600xf32>
    %23 = arith.mulf %0, %22 : vector<4x1600xf32>
    %c0_10 = arith.constant 0 : index
    %c0_11 = arith.constant 0 : index
    %24 = vector.load %arg4[%c0_10, %c0_11] : memref<4x1600xf32, #tpu.memory_space<vmem>>, vector<4x1600xf32>
    tpu.vector_store %arg4[%c0_10, %c0_11], %23 {strides = array<i32>} : memref<4x1600xf32, #tpu.memory_space<vmem>>, vector<4x1600xf32>,
    return
  }
  func.func @transform_0(%arg0: i32) -> (i32, i32) {
    %c0_i32 = arith.constant 0 : i32
    %c0_i32_0 = arith.constant 0 : i32
    return %arg0, %c0_i32 : i32, i32
  }
  func.func @transform_1(%arg0: i32) -> (i32, i32) {
    %c0_i32 = arith.constant 0 : i32
    %c0_i32_0 = arith.constant 0 : i32
    %c0_i32_1 = arith.constant 0 : i32
    return %c0_i32, %c0_i32_0 : i32, i32
  }
  func.func @transform_2(%arg0: i32) -> (i32, i32) {
    %c0_i32 = arith.constant 0 : i32
    %c0_i32_0 = arith.constant 0 : i32
    %c0_i32_1 = arith.constant 0 : i32
    return %c0_i32, %c0_i32_0 : i32, i32
  }
  func.func @transform_3(%arg0: i32) -> (i32, i32) {
    %c0_i32 = arith.constant 0 : i32
    %c0_i32_0 = arith.constant 0 : i32
    return %arg0, %c0_i32 : i32, i32
  }
}

</mosaic_0001>

<llo_original>
// kernel: model_forward.1
$region0: #{model_forward.1}
  #allocation0 [shape = 'u32[]', space=smem, size = 0x4, offset = 0x4, fixed_abs, tag = 'smem constant byte address 0x4 - core index']
  #allocation1 [shape = 'u32[144,128]{1,0:T(1,128)}', space=vmem, size = 0x12000, scoped, tag = 'internal scratch']
  %s0 = inlined_call_operand.vmem [shape: f32[4,1600], index: 0, kind: input, shape index: {}]
  %s1 = inlined_call_operand.vmem [shape: f32[1600,64], index: 1, kind: input, shape index: {}]
  %s2 = inlined_call_operand.vmem [shape: f32[64,1600], index: 2, kind: input, shape index: {}]
  %s3 = inlined_call_operand.vmem [shape: f32[4,1600], index: 3, kind: output, shape index: {}]
  %s4 = sld [smem:[#allocation0]]
  $region22: #{model_forward.1} parent=0
    _
  %s6 = ssub.s32 1, %s4
  %s7 = scalar_select 0, %s6, %s4
  // Predicated region
  $region2: #{model_forward.1} parent=0 // pred_check
    _
  $region3: #{model_forward.1} parent=0 // pred_check_branch
    %9 = sbr.rel (0) target = $region5
  $region4: #{model_forward.1} parent=0 // pred_region
    _
  $region5: #{model_forward.1} parent=0 // pred_fallthru
    _
  // Predicated region
  $region6: #{model_forward.1} parent=0 // pred_check
    _
  $region7: #{model_forward.1} parent=0 // pred_check_branch
    %11 = sbr.rel (0) target = $region9
  $region8: #{model_forward.1} parent=0 // pred_region
    _
  $region9: #{model_forward.1} parent=0 // pred_fallthru
    _
  // Predicated region
  $region10: #{model_forward.1} parent=0 // pred_check
    _
  $region11: #{model_forward.1} parent=0 // pred_check_branch
    %13 = sbr.rel (0) target = $region13
  $region12: #{model_forward.1} parent=0 // pred_region
    _
  $region13: #{model_forward.1} parent=0 // pred_fallthru
    _
  %v14 = vld [vmem:[%s0] sm:$0xff]
  %v15 = vld [vmem:[%s0 + $0x8] sm:$0xff]
  %v16 = vld [vmem:[%s0 + $0x10] sm:$0xff]
  %v17 = vld [vmem:[%s0 + $0x18] sm:$0xff]
  %v18 = vld [vmem:[%s0 + $0x20] sm:$0xff]
  %v19 = vld [vmem:[%s0 + $0x28] sm:$0xff]
  %v20 = vld [vmem:[%s0 + $0x30] sm:$0xf]
  %v21 = vld [vmem:[%s1] sm:$0xff]
  %v22 = vld [vmem:[%s1 + $0x8] sm:$0xff]
  %v23 = vld [vmem:[%s1 + $0x10] sm:$0xff]
  %v24 = vld [vmem:[%s1 + $0x18] sm:$0xff]
  %v25 = vld [vmem:[%s1 + $0x20] sm:$0xff]
  %v26 = vld [vmem:[%s1 + $0x28] sm:$0xff]
  %v27 = vld [vmem:[%s1 + $0x30] sm:$0xff]
  %v28 = vld [vmem:[%s1 + $0x38] sm:$0xff]
  %v29 = vld [vmem:[%s1 + $0x40] sm:$0xff]
  %v30 = vld [vmem:[%s1 + $0x48] sm:$0xff]
  %v31 = vld [vmem:[%s1 + $0x50] sm:$0xff]
  %v32 = vld [vmem:[%s1 + $0x58] sm:$0xff]
  %v33 = vld [vmem:[%s1 + $0x60] sm:$0xff]
  %v34 = vld [vmem:[%s1 + $0x68] sm:$0xff]
  %v35 = vld [vmem:[%s1 + $0x70] sm:$0xff]
  %v36 = vld [vmem:[%s1 + $0x78] sm:$0xff]
  %v37 = vld [vmem:[%s1 + $0x80] sm:$0xff]
  %v38 = vld [vmem:[%s1 + $0x88] sm:$0xff]
  %v39 = vld [vmem:[%s1 + $0x90] sm:$0xff]
  %v40 = vld [vmem:[%s1 + $0x98] sm:$0xff]
  %v41 = vld [vmem:[%s1 + $0xa0] sm:$0xff]
  %v42 = vld [vmem:[%s1 + $0xa8] sm:$0xff]
  %v43 = vld [vmem:[%s1 + $0xb0] sm:$0xff]
  %v44 = vld [vmem:[%s1 + $0xb8] sm:$0xff]
  %v45 = vld [vmem:[%s1 + $0xc0] sm:$0xff]
  %v46 = vld [vmem:[%s1 + $0xc8] sm:$0xff]
  %v47 = vld [vmem:[%s1 + $0xd0] sm:$0xff]
  %v48 = vld [vmem:[%s1 + $0xd8] sm:$0xff]
  %v49 = vld [vmem:[%s1 + $0xe0] sm:$0xff]
  %v50 = vld [vmem:[%s1 + $0xe8] sm:$0xff]
  %v51 = vld [vmem:[%s1 + $0xf0] sm:$0xff]
  %v52 = vld [vmem:[%s1 + $0xf8] sm:$0xff]
  %v53 = vld [vmem:[%s1 + $0x100] sm:$0xff]
  %v54 = vld [vmem:[%s1 + $0x108] sm:$0xff]
  %v55 = vld [vmem:[%s1 + $0x110] sm:$0xff]
  %v56 = vld [vmem:[%s1 + $0x118] sm:$0xff]
  %v57 = vld [vmem:[%s1 + $0x120] sm:$0xff]
  %v58 = vld [vmem:[%s1 + $0x128] sm:$0xff]
  %v59 = vld [vmem:[%s1 + $0x130] sm:$0xff]
  %v60 = vld [vmem:[%s1 + $0x138] sm:$0xff]
  %v61 = vld [vmem:[%s1 + $0x140] sm:$0xff]
  %v62 = vld [vmem:[%s1 + $0x148] sm:$0xff]
  %v63 = vld [vmem:[%s1 + $0x150] sm:$0xff]
  %v64 = vld [vmem:[%s1 + $0x158] sm:$0xff]
  %v65 = vld [vmem:[%s1 + $0x160] sm:$0xff]
  %v66 = vld [vmem:[%s1 + $0x168] sm:$0xff]
  %v67 = vld [vmem:[%s1 + $0x170] sm:$0xff]
  %v68 = vld [vmem:[%s1 + $0x178] sm:$0xff]
  %v69 = vld [vmem:[%s1 + $0x180] sm:$0xff]
  %v70 = vld [vmem:[%s1 + $0x188] sm:$0xff]
  %v71 = vld [vmem:[%s1 + $0x190] sm:$0xff]
  %v72 = vld [vmem:[%s1 + $0x198] sm:$0xff]
  %v73 = vld [vmem:[%s1 + $0x1a0] sm:$0xff]
  %v74 = vld [vmem:[%s1 + $0x1a8] sm:$0xff]
  %v75 = vld [vmem:[%s1 + $0x1b0] sm:$0xff]
  %v76 = vld [vmem:[%s1 + $0x1b8] sm:$0xff]
  %v77 = vld [vmem:[%s1 + $0x1c0] sm:$0xff]
  %v78 = vld [vmem:[%s1 + $0x1c8] sm:$0xff]
  %v79 = vld [vmem:[%s1 + $0x1d0] sm:$0xff]
  %v80 = vld [vmem:[%s1 + $0x1d8] sm:$0xff]
  %v81 = vld [vmem:[%s1 + $0x1e0] sm:$0xff]
  %v82 = vld [vmem:[%s1 + $0x1e8] sm:$0xff]
  %v83 = vld [vmem:[%s1 + $0x1f0] sm:$0xff]
  %v84 = vld [vmem:[%s1 + $0x1f8] sm:$0xff]
  %v85 = vld [vmem:[%s1 + $0x200] sm:$0xff]
  %v86 = vld [vmem:[%s1 + $0x208] sm:$0xff]
  %v87 = vld [vmem:[%s1 + $0x210] sm:$0xff]
  %v88 = vld [vmem:[%s1 + $0x218] sm:$0xff]
  %v89 = vld [vmem:[%s1 + $0x220] sm:$0xff]
  %v90 = vld [vmem:[%s1 + $0x228] sm:$0xff]
  %v91 = vld [vmem:[%s1 + $0x230] sm:$0xff]
  %v92 = vld [vmem:[%s1 + $0x238] sm:$0xff]
  %v93 = vld [vmem:[%s1 + $0x240] sm:$0xff]
  %v94 = vld [vmem:[%s1 + $0x248] sm:$0xff]
  %v95 = vld [vmem:[%s1 + $0x250] sm:$0xff]
  %v96 = vld [vmem:[%s1 + $0x258] sm:$0xff]
  %v97 = vld [vmem:[%s1 + $0x260] sm:$0xff]
  %v98 = vld [vmem:[%s1 + $0x268] sm:$0xff]
  %v99 = vld [vmem:[%s1 + $0x270] sm:$0xff]
  %v100 = vld [vmem:[%s1 + $0x278] sm:$0xff]
  %v101 = vld [vmem:[%s1 + $0x280] sm:$0xff]
  %v102 = vld [vmem:[%s1 + $0x288] sm:$0xff]
  %v103 = vld [vmem:[%s1 + $0x290] sm:$0xff]
  %v104 = vld [vmem:[%s1 + $0x298] sm:$0xff]
  %v105 = vld [vmem:[%s1 + $0x2a0] sm:$0xff]
  %v106 = vld [vmem:[%s1 + $0x2a8] sm:$0xff]
  %v107 = vld [vmem:[%s1 + $0x2b0] sm:$0xff]
  %v108 = vld [vmem:[%s1 + $0x2b8] sm:$0xff]
  %v109 = vld [vmem:[%s1 + $0x2c0] sm:$0xff]
  %v110 = vld [vmem:[%s1 + $0x2c8] sm:$0xff]
  %v111 = vld [vmem:[%s1 + $0x2d0] sm:$0xff]
  %v112 = vld [vmem:[%s1 + $0x2d8] sm:$0xff]
  %v113 = vld [vmem:[%s1 + $0x2e0] sm:$0xff]
  %v114 = vld [vmem:[%s1 + $0x2e8] sm:$0xff]
  %v115 = vld [vmem:[%s1 + $0x2f0] sm:$0xff]
  %v116 = vld [vmem:[%s1 + $0x2f8] sm:$0xff]
  %v117 = vld [vmem:[%s1 + $0x300] sm:$0xff]
  %v118 = vld [vmem:[%s1 + $0x308] sm:$0xff]
  %v119 = vld [vmem:[%s1 + $0x310] sm:$0xff]
  %v120 = vld [vmem:[%s1 + $0x318] sm:$0xff]
  %v121 = vld [vmem:[%s1 + $0x320] sm:$0xff]
  %v122 = vld [vmem:[%s1 + $0x328] sm:$0xff]
  %v123 = vld [vmem:[%s1 + $0x330] sm:$0xff]
  %v124 = vld [vmem:[%s1 + $0x338] sm:$0xff]
  %v125 = vld [vmem:[%s1 + $0x340] sm:$0xff]
  %v126 = vld [vmem:[%s1 + $0x348] sm:$0xff]
  %v127 = vld [vmem:[%s1 + $0x350] sm:$0xff]
  %v128 = vld [vmem:[%s1 + $0x358] sm:$0xff]
  %v129 = vld [vmem:[%s1 + $0x360] sm:$0xff]
  %v130 = vld [vmem:[%s1 + $0x368] sm:$0xff]
  %v131 = vld [vmem:[%s1 + $0x370] sm:$0xff]
  %v132 = vld [vmem:[%s1 + $0x378] sm:$0xff]
  %v133 = vld [vmem:[%s1 + $0x380] sm:$0xff]
  %v134 = vld [vmem:[%s1 + $0x388] sm:$0xff]
  %v135 = vld [vmem:[%s1 + $0x390] sm:$0xff]
  %v136 = vld [vmem:[%s1 + $0x398] sm:$0xff]
  %v137 = vld [vmem:[%s1 + $0x3a0] sm:$0xff]
  %v138 = vld [vmem:[%s1 + $0x3a8] sm:$0xff]
  %v139 = vld [vmem:[%s1 + $0x3b0] sm:$0xff]
  %v140 = vld [vmem:[%s1 + $0x3b8] sm:$0xff]
  %v141 = vld [vmem:[%s1 + $0x3c0] sm:$0xff]
  %v142 = vld [vmem:[%s1 + $0x3c8] sm:$0xff]
  %v143 = vld [vmem:[%s1 + $0x3d0] sm:$0xff]
  %v144 = vld [vmem:[%s1 + $0x3d8] sm:$0xff]
  %v145 = vld [vmem:[%s1 + $0x3e0] sm:$0xff]
  %v146 = vld [vmem:[%s1 + $0x3e8] sm:$0xff]
  %v147 = vld [vmem:[%s1 + $0x3f0] sm:$0xff]
  %v148 = vld [vmem:[%s1 + $0x3f8] sm:$0xff]
  %v149 = vld [vmem:[%s1 + $0x400] sm:$0xff]
  %v150 = vld [vmem:[%s1 + $0x408] sm:$0xff]
  %v151 = vld [vmem:[%s1 + $0x410] sm:$0xff]
  %v152 = vld [vmem:[%s1 + $0x418] sm:$0xff]
  %v153 = vld [vmem:[%s1 + $0x420] sm:$0xff]
  %v154 = vld [vmem:[%s1 + $0x428] sm:$0xff]
  %v155 = vld [vmem:[%s1 + $0x430] sm:$0xff]
  %v156 = vld [vmem:[%s1 + $0x438] sm:$0xff]
  %v157 = vld [vmem:[%s1 + $0x440] sm:$0xff]
  %v158 = vld [vmem:[%s1 + $0x448] sm:$0xff]
  %v159 = vld [vmem:[%s1 + $0x450] sm:$0xff]
  %v160 = vld [vmem:[%s1 + $0x458] sm:$0xff]
  %v161 = vld [vmem:[%s1 + $0x460] sm:$0xff]
  %v162 = vld [vmem:[%s1 + $0x468] sm:$0xff]
  %v163 = vld [vmem:[%s1 + $0x470] sm:$0xff]
  %v164 = vld [vmem:[%s1 + $0x478] sm:$0xff]
  %v165 = vld [vmem:[%s1 + $0x480] sm:$0xff]
  %v166 = vld [vmem:[%s1 + $0x488] sm:$0xff]
  %v167 = vld [vmem:[%s1 + $0x490] sm:$0xff]
  %v168 = vld [vmem:[%s1 + $0x498] sm:$0xff]
  %v169 = vld [vmem:[%s1 + $0x4a0] sm:$0xff]
  %v170 = vld [vmem:[%s1 + $0x4a8] sm:$0xff]
  %v171 = vld [vmem:[%s1 + $0x4b0] sm:$0xff]
  %v172 = vld [vmem:[%s1 + $0x4b8] sm:$0xff]
  %v173 = vld [vmem:[%s1 + $0x4c0] sm:$0xff]
  %v174 = vld [vmem:[%s1 + $0x4c8] sm:$0xff]
  %v175 = vld [vmem:[%s1 + $0x4d0] sm:$0xff]
  %v176 = vld [vmem:[%s1 + $0x4d8] sm:$0xff]
  %v177 = vld [vmem:[%s1 + $0x4e0] sm:$0xff]
  %v178 = vld [vmem:[%s1 + $0x4e8] sm:$0xff]
  %v179 = vld [vmem:[%s1 + $0x4f0] sm:$0xff]
  %v180 = vld [vmem:[%s1 + $0x4f8] sm:$0xff]
  %v181 = vld [vmem:[%s1 + $0x500] sm:$0xff]
  %v182 = vld [vmem:[%s1 + $0x508] sm:$0xff]
  %v183 = vld [vmem:[%s1 + $0x510] sm:$0xff]
  %v184 = vld [vmem:[%s1 + $0x518] sm:$0xff]
  %v185 = vld [vmem:[%s1 + $0x520] sm:$0xff]
  %v186 = vld [vmem:[%s1 + $0x528] sm:$0xff]
  %v187 = vld [vmem:[%s1 + $0x530] sm:$0xff]
  %v188 = vld [vmem:[%s1 + $0x538] sm:$0xff]
  %v189 = vld [vmem:[%s1 + $0x540] sm:$0xff]
  %v190 = vld [vmem:[%s1 + $0x548] sm:$0xff]
  %v191 = vld [vmem:[%s1 + $0x550] sm:$0xff]
  %v192 = vld [vmem:[%s1 + $0x558] sm:$0xff]
  %v193 = vld [vmem:[%s1 + $0x560] sm:$0xff]
  %v194 = vld [vmem:[%s1 + $0x568] sm:$0xff]
  %v195 = vld [vmem:[%s1 + $0x570] sm:$0xff]
  %v196 = vld [vmem:[%s1 + $0x578] sm:$0xff]
  %v197 = vld [vmem:[%s1 + $0x580] sm:$0xff]
  %v198 = vld [vmem:[%s1 + $0x588] sm:$0xff]
  %v199 = vld [vmem:[%s1 + $0x590] sm:$0xff]
  %v200 = vld [vmem:[%s1 + $0x598] sm:$0xff]
  %v201 = vld [vmem:[%s1 + $0x5a0] sm:$0xff]
  %v202 = vld [vmem:[%s1 + $0x5a8] sm:$0xff]
  %v203 = vld [vmem:[%s1 + $0x5b0] sm:$0xff]
  %v204 = vld [vmem:[%s1 + $0x5b8] sm:$0xff]
  %v205 = vld [vmem:[%s1 + $0x5c0] sm:$0xff]
  %v206 = vld [vmem:[%s1 + $0x5c8] sm:$0xff]
  %v207 = vld [vmem:[%s1 + $0x5d0] sm:$0xff]
  %v208 = vld [vmem:[%s1 + $0x5d8] sm:$0xff]
  %v209 = vld [vmem:[%s1 + $0x5e0] sm:$0xff]
  %v210 = vld [vmem:[%s1 + $0x5e8] sm:$0xff]
  %v211 = vld [vmem:[%s1 + $0x5f0] sm:$0xff]
  %v212 = vld [vmem:[%s1 + $0x5f8] sm:$0xff]
  %v213 = vld [vmem:[%s1 + $0x600] sm:$0xff]
  %v214 = vld [vmem:[%s1 + $0x608] sm:$0xff]
  %v215 = vld [vmem:[%s1 + $0x610] sm:$0xff]
  %v216 = vld [vmem:[%s1 + $0x618] sm:$0xff]
  %v217 = vld [vmem:[%s1 + $0x620] sm:$0xff]
  %v218 = vld [vmem:[%s1 + $0x628] sm:$0xff]
  %v219 = vld [vmem:[%s1 + $0x630] sm:$0xff]
  %v220 = vld [vmem:[%s1 + $0x638] sm:$0xff]
  %v221 = vld [vmem:[%s2] sm:$0xff]
  %v222 = vld [vmem:[%s2 + $0x8] sm:$0xff]
  %v223 = vld [vmem:[%s2 + $0x10] sm:$0xff]
  %v224 = vld [vmem:[%s2 + $0x18] sm:$0xff]
  %v225 = vld [vmem:[%s2 + $0x20] sm:$0xff]
  %v226 = vld [vmem:[%s2 + $0x28] sm:$0xff]
  %v227 = vld [vmem:[%s2 + $0x30] sm:$0xff]
  %v228 = vld [vmem:[%s2 + $0x38] sm:$0xff]
  %v229 = vld [vmem:[%s2 + $0x40] sm:$0xff]
  %v230 = vld [vmem:[%s2 + $0x48] sm:$0xff]
  %v231 = vld [vmem:[%s2 + $0x50] sm:$0xff]
  %v232 = vld [vmem:[%s2 + $0x58] sm:$0xff]
  %v233 = vld [vmem:[%s2 + $0x60] sm:$0xff]
  %v234 = vld [vmem:[%s2 + $0x68] sm:$0xff]
  %v235 = vld [vmem:[%s2 + $0x70] sm:$0xff]
  %v236 = vld [vmem:[%s2 + $0x78] sm:$0xff]
  %v237 = vld [vmem:[%s2 + $0x80] sm:$0xff]
  %v238 = vld [vmem:[%s2 + $0x88] sm:$0xff]
  %v239 = vld [vmem:[%s2 + $0x90] sm:$0xff]
  %v240 = vld [vmem:[%s2 + $0x98] sm:$0xff]
  %v241 = vld [vmem:[%s2 + $0xa0] sm:$0xff]
  %v242 = vld [vmem:[%s2 + $0xa8] sm:$0xff]
  %v243 = vld [vmem:[%s2 + $0xb0] sm:$0xff]
  %v244 = vld [vmem:[%s2 + $0xb8] sm:$0xff]
  %v245 = vld [vmem:[%s2 + $0xc0] sm:$0xff]
  %v246 = vld [vmem:[%s2 + $0xc8] sm:$0xff]
  %v247 = vld [vmem:[%s2 + $0xd0] sm:$0xff]
  %v248 = vld [vmem:[%s2 + $0xd8] sm:$0xff]
  %v249 = vld [vmem:[%s2 + $0xe0] sm:$0xff]
  %v250 = vld [vmem:[%s2 + $0xe8] sm:$0xff]
  %v251 = vld [vmem:[%s2 + $0xf0] sm:$0xff]
  %v252 = vld [vmem:[%s2 + $0xf8] sm:$0xff]
  %v253 = vld [vmem:[%s2 + $0x100] sm:$0xff]
  %v254 = vld [vmem:[%s2 + $0x108] sm:$0xff]
  %v255 = vld [vmem:[%s2 + $0x110] sm:$0xff]
  %v256 = vld [vmem:[%s2 + $0x118] sm:$0xff]
  %v257 = vld [vmem:[%s2 + $0x120] sm:$0xff]
  %v258 = vld [vmem:[%s2 + $0x128] sm:$0xff]
  %v259 = vld [vmem:[%s2 + $0x130] sm:$0xff]
  %v260 = vld [vmem:[%s2 + $0x138] sm:$0xff]
  %v261 = vld [vmem:[%s2 + $0x140] sm:$0xff]
  %v262 = vld [vmem:[%s2 + $0x148] sm:$0xff]
  %v263 = vld [vmem:[%s2 + $0x150] sm:$0xff]
  %v264 = vld [vmem:[%s2 + $0x158] sm:$0xff]
  %v265 = vld [vmem:[%s2 + $0x160] sm:$0xff]
  %v266 = vld [vmem:[%s2 + $0x168] sm:$0xff]
  %v267 = vld [vmem:[%s2 + $0x170] sm:$0xff]
  %v268 = vld [vmem:[%s2 + $0x178] sm:$0xff]
  %v269 = vld [vmem:[%s2 + $0x180] sm:$0xff]
  %v270 = vld [vmem:[%s2 + $0x188] sm:$0xff]
  %v271 = vld [vmem:[%s2 + $0x190] sm:$0xff]
  %v272 = vld [vmem:[%s2 + $0x198] sm:$0xff]
  %v273 = vld [vmem:[%s2 + $0x1a0] sm:$0xff]
  %v274 = vld [vmem:[%s2 + $0x1a8] sm:$0xff]
  %v275 = vld [vmem:[%s2 + $0x1b0] sm:$0xff]
  %v276 = vld [vmem:[%s2 + $0x1b8] sm:$0xff]
  %v277 = vld [vmem:[%s2 + $0x1c0] sm:$0xff]
  %v278 = vld [vmem:[%s2 + $0x1c8] sm:$0xff]
  %v279 = vld [vmem:[%s2 + $0x1d0] sm:$0xff]
  %v280 = vld [vmem:[%s2 + $0x1d8] sm:$0xff]
  %v281 = vld [vmem:[%s2 + $0x1e0] sm:$0xff]
  %v282 = vld [vmem:[%s2 + $0x1e8] sm:$0xff]
  %v283 = vld [vmem:[%s2 + $0x1f0] sm:$0xff]
  %v284 = vld [vmem:[%s2 + $0x1f8] sm:$0xff]
  %v285 = vld [vmem:[%s2 + $0x200] sm:$0xff]
  %v286 = vld [vmem:[%s2 + $0x208] sm:$0xff]
  %v287 = vld [vmem:[%s2 + $0x210] sm:$0xff]
  %v288 = vld [vmem:[%s2 + $0x218] sm:$0xff]
  %v289 = vld [vmem:[%s2 + $0x220] sm:$0xff]
  %v290 = vld [vmem:[%s2 + $0x228] sm:$0xff]
  %v291 = vld [vmem:[%s2 + $0x230] sm:$0xff]
  %v292 = vld [vmem:[%s2 + $0x238] sm:$0xff]
  %v293 = vld [vmem:[%s2 + $0x240] sm:$0xff]
  %v294 = vld [vmem:[%s2 + $0x248] sm:$0xff]
  %v295 = vld [vmem:[%s2 + $0x250] sm:$0xff]
  %v296 = vld [vmem:[%s2 + $0x258] sm:$0xff]
  %v297 = vld [vmem:[%s2 + $0x260] sm:$0xff]
  %v298 = vld [vmem:[%s2 + $0x268] sm:$0xff]
  %v299 = vld [vmem:[%s2 + $0x270] sm:$0xff]
  %v300 = vld [vmem:[%s2 + $0x278] sm:$0xff]
  %v301 = vld [vmem:[%s2 + $0x280] sm:$0xff]
  %v302 = vld [vmem:[%s2 + $0x288] sm:$0xff]
  %v303 = vld [vmem:[%s2 + $0x290] sm:$0xff]
  %v304 = vld [vmem:[%s2 + $0x298] sm:$0xff]
  %v305 = vld [vmem:[%s2 + $0x2a0] sm:$0xff]
  %v306 = vld [vmem:[%s2 + $0x2a8] sm:$0xff]
  %v307 = vld [vmem:[%s2 + $0x2b0] sm:$0xff]
  %v308 = vld [vmem:[%s2 + $0x2b8] sm:$0xff]
  %v309 = vld [vmem:[%s2 + $0x2c0] sm:$0xff]
  %v310 = vld [vmem:[%s2 + $0x2c8] sm:$0xff]
  %v311 = vld [vmem:[%s2 + $0x2d0] sm:$0xff]
  %v312 = vld [vmem:[%s2 + $0x2d8] sm:$0xff]
  %v313 = vld [vmem:[%s2 + $0x2e0] sm:$0xff]
  %v314 = vld [vmem:[%s2 + $0x2e8] sm:$0xff]
  %v315 = vld [vmem:[%s2 + $0x2f0] sm:$0xff]
  %v316 = vld [vmem:[%s2 + $0x2f8] sm:$0xff]
  %v317 = vld [vmem:[%s2 + $0x300] sm:$0xff]
  %v318 = vld [vmem:[%s2 + $0x308] sm:$0xff]
  %v319 = vld [vmem:[%s2 + $0x310] sm:$0xff]
  %v320 = vld [vmem:[%s2 + $0x318] sm:$0xff]
  %v321 = vld [vmem:[%s2 + $0x320] sm:$0xff]
  %v322 = vld [vmem:[%s2 + $0x328] sm:$0xff]
  %v323 = vld [vmem:[%s2 + $0x330] sm:$0xff]
  %v324 = vld [vmem:[%s2 + $0x338] sm:$0xff]
  %v331 = vcombine.high %v14, %v14
  %v332 = vcombine.high %v15, %v15
  %v333 = vcombine.high %v16, %v16
  %v334 = vcombine.high %v17, %v17
  %v335 = vcombine.high %v18, %v18
  %v336 = vcombine.high %v19, %v19
  %v343 = vpack.c.bf16 %v14, %v14
  %v344 = vpack.c.bf16 %v331, %v331
  %v345 = vpack.c.bf16 %v15, %v15
  %v346 = vpack.c.bf16 %v332, %v332
  %v347 = vpack.c.bf16 %v16, %v16
  %v348 = vpack.c.bf16 %v333, %v333
  %v349 = vpack.c.bf16 %v17, %v17
  %v350 = vpack.c.bf16 %v334, %v334
  %v351 = vpack.c.bf16 %v18, %v18
  %v352 = vpack.c.bf16 %v335, %v335
  %v353 = vpack.c.bf16 %v19, %v19
  %v354 = vpack.c.bf16 %v336, %v336
  %v355 = vpack.c.bf16 %v20, %v20
  %v356 = vunpack.c.l.bf16 %v343
  %v357 = vunpack.c.l.bf16 %v344
  %v358 = vunpack.c.l.bf16 %v345
  %v359 = vunpack.c.l.bf16 %v346
  %v360 = vunpack.c.l.bf16 %v347
  %v361 = vunpack.c.l.bf16 %v348
  %v362 = vunpack.c.l.bf16 %v349
  %v363 = vunpack.c.l.bf16 %v350
  %v364 = vunpack.c.l.bf16 %v351
  %v365 = vunpack.c.l.bf16 %v352
  %v366 = vunpack.c.l.bf16 %v353
  %v367 = vunpack.c.l.bf16 %v354
  %v368 = vunpack.c.l.bf16 %v355
  %v382 = vcombine.low %v356, %v357
  %v383 = vcombine.low %v358, %v359
  %v384 = vcombine.low %v360, %v361
  %v385 = vcombine.low %v362, %v363
  %v386 = vcombine.low %v364, %v365
  %v387 = vcombine.low %v366, %v367
  %v394 = vsub.f32 %v14, %v382
  %v395 = vsub.f32 %v15, %v383
  %v396 = vsub.f32 %v16, %v384
  %v397 = vsub.f32 %v17, %v385
  %v398 = vsub.f32 %v18, %v386
  %v399 = vsub.f32 %v19, %v387
  %v400 = vsub.f32 %v20, %v368
  %v408 = vcombine.high %v394, %v394
  %v409 = vcombine.high %v395, %v395
  %v410 = vcombine.high %v396, %v396
  %v411 = vcombine.high %v397, %v397
  %v412 = vcombine.high %v398, %v398
  %v413 = vcombine.high %v399, %v399
  %vm420 = vcmask 523264
  %v421 = vsel %vm420, %v400, 0
  %423 = vmatprep.subr.mxu0 0.0
  %424 = vmatpush1.msra.mxu0 %v21
  %425 = vmatprep.subr.mxu0 0.0
  %426 = vmatpush1.msra.mxu0 %v22
  %427 = vmatprep.subr.mxu0 0.0
  %428 = vmatpush1.msra.mxu0 %v23
  %429 = vmatprep.subr.mxu0 0.0
  %430 = vmatpush1.msra.mxu0 %v24
  %431 = vmatprep.subr.mxu0 0.0
  %432 = vmatpush1.msra.mxu0 %v25
  %433 = vmatprep.subr.mxu0 0.0
  %434 = vmatpush1.msra.mxu0 %v26
  %435 = vmatprep.subr.mxu0 0.0
  %436 = vmatpush1.msra.mxu0 %v27
  %437 = vmatprep.subr.mxu0 0.0
  %438 = vmatpush1.msra.mxu0 %v28
  %439 = vmatprep.subr.mxu0 0.0
  %440 = vmatpush1.msra.mxu0 %v29
  %441 = vmatprep.subr.mxu0 0.0
  %442 = vmatpush1.msra.mxu0 %v30
  %443 = vmatprep.subr.mxu0 0.0
  %444 = vmatpush1.msra.mxu0 %v31
  %445 = vmatprep.subr.mxu0 0.0
  %446 = vmatpush1.msra.mxu0 %v32
  %447 = vmatprep.subr.mxu0 0.0
  %448 = vmatpush1.msra.mxu0 %v33
  %449 = vmatprep.subr.mxu0 0.0
  %450 = vmatpush1.msra.mxu0 %v34
  %451 = vmatprep.subr.mxu0 0.0
  %452 = vmatpush1.msra.mxu0 %v35
  %453 = vmatprep.subr.mxu0 0.0
  %454 = vmatpush1.msra.mxu0 %v36
  %455 = vmatprep.subr.mxu0 0.0
  %456 = vmatpush1.msra.mxu0 %v37
  %457 = vmatprep.subr.mxu0 0.0
  %458 = vmatpush1.msra.mxu0 %v38
  %459 = vmatprep.subr.mxu0 0.0
  %460 = vmatpush1.msra.mxu0 %v39
  %461 = vmatprep.subr.mxu0 0.0
  %462 = vmatpush1.msra.mxu0 %v40
  %463 = vmatprep.subr.mxu0 0.0
  %464 = vmatpush1.msra.mxu0 %v41
  %465 = vmatprep.subr.mxu0 0.0
  %466 = vmatpush1.msra.mxu0 %v42
  %467 = vmatprep.subr.mxu0 0.0
  %468 = vmatpush1.msra.mxu0 %v43
  %469 = vmatprep.subr.mxu0 0.0
  %470 = vmatpush1.msra.mxu0 %v44
  %471 = vmatprep.subr.mxu0 0.0
  %472 = vmatpush1.msra.mxu0 %v45
  %473 = vmatprep.subr.mxu0 0.0
  %474 = vmatpush1.msra.mxu0 %v46
  %475 = vmatprep.subr.mxu0 0.0
  %476 = vmatpush1.msra.mxu0 %v47
  %477 = vmatprep.subr.mxu0 0.0
  %478 = vmatpush1.msra.mxu0 %v48
  %479 = vmatprep.subr.mxu0 0.0
  %480 = vmatpush1.msra.mxu0 %v49
  %481 = vmatprep.subr.mxu0 0.0
  %482 = vmatpush1.msra.mxu0 %v50
  %483 = vmatprep.subr.mxu0 0.0
  %484 = vmatpush1.msra.mxu0 %v51
  %485 = vmatprep.subr.mxu0 0.0
  %486 = vmatpush1.msra.mxu0 %v52
  %487 = vmatprep.mubr.f32.mxu0 %v408
  %488 = vmatmul.mubr.f32.gmra.mrb[0].mxu0 %v394
  %v489 = vpop.f32.mrb[0].mxu0
  %v490 = vadd.f32 0.0, %v489
  %v491 = vpop.f32.mrb[0].mxu0
  %492 = vdwg.mxu0
  %493 = vmatprep.subr.mxu0 0.0
  %494 = vmatpush1.msra.mxu0 %v53
  %495 = vmatprep.subr.mxu0 0.0
  %496 = vmatpush1.msra.mxu0 %v54
  %497 = vmatprep.subr.mxu0 0.0
  %498 = vmatpush1.msra.mxu0 %v55
  %499 = vmatprep.subr.mxu0 0.0
  %500 = vmatpush1.msra.mxu0 %v56
  %501 = vmatprep.subr.mxu0 0.0
  %502 = vmatpush1.msra.mxu0 %v57
  %503 = vmatprep.subr.mxu0 0.0
  %504 = vmatpush1.msra.mxu0 %v58
  %505 = vmatprep.subr.mxu0 0.0
  %506 = vmatpush1.msra.mxu0 %v59
  %507 = vmatprep.subr.mxu0 0.0
  %508 = vmatpush1.msra.mxu0 %v60
  %509 = vmatprep.subr.mxu0 0.0
  %510 = vmatpush1.msra.mxu0 %v61
  %511 = vmatprep.subr.mxu0 0.0
  %512 = vmatpush1.msra.mxu0 %v62
  %513 = vmatprep.subr.mxu0 0.0
  %514 = vmatpush1.msra.mxu0 %v63
  %515 = vmatprep.subr.mxu0 0.0
  %516 = vmatpush1.msra.mxu0 %v64
  %517 = vmatprep.subr.mxu0 0.0
  %518 = vmatpush1.msra.mxu0 %v65
  %519 = vmatprep.subr.mxu0 0.0
  %520 = vmatpush1.msra.mxu0 %v66
  %521 = vmatprep.subr.mxu0 0.0
  %522 = vmatpush1.msra.mxu0 %v67
  %523 = vmatprep.subr.mxu0 0.0
  %524 = vmatpush1.msra.mxu0 %v68
  %525 = vmatprep.subr.mxu0 0.0
  %526 = vmatpush1.msra.mxu0 %v69
  %527 = vmatprep.subr.mxu0 0.0
  %528 = vmatpush1.msra.mxu0 %v70
  %529 = vmatprep.subr.mxu0 0.0
  %530 = vmatpush1.msra.mxu0 %v71
  %531 = vmatprep.subr.mxu0 0.0
  %532 = vmatpush1.msra.mxu0 %v72
  %533 = vmatprep.subr.mxu0 0.0
  %534 = vmatpush1.msra.mxu0 %v73
  %535 = vmatprep.subr.mxu0 0.0
  %536 = vmatpush1.msra.mxu0 %v74
  %537 = vmatprep.subr.mxu0 0.0
  %538 = vmatpush1.msra.mxu0 %v75
  %539 = vmatprep.subr.mxu0 0.0
  %540 = vmatpush1.msra.mxu0 %v76
  %541 = vmatprep.subr.mxu0 0.0
  %542 = vmatpush1.msra.mxu0 %v77
  %543 = vmatprep.subr.mxu0 0.0
  %544 = vmatpush1.msra.mxu0 %v78
  %545 = vmatprep.subr.mxu0 0.0
  %546 = vmatpush1.msra.mxu0 %v79
  %547 = vmatprep.subr.mxu0 0.0
  %548 = vmatpush1.msra.mxu0 %v80
  %549 = vmatprep.subr.mxu0 0.0
  %550 = vmatpush1.msra.mxu0 %v81
  %551 = vmatprep.subr.mxu0 0.0
  %552 = vmatpush1.msra.mxu0 %v82
  %553 = vmatprep.subr.mxu0 0.0
  %554 = vmatpush1.msra.mxu0 %v83
  %555 = vmatprep.subr.mxu0 0.0
  %556 = vmatpush1.msra.mxu0 %v84
  %557 = vmatprep.mubr.f32.mxu0 %v409
  %558 = vmatmul.mubr.f32.gmra.mrb[0].mxu0 %v395
  %v559 = vpop.f32.mrb[0].mxu0
  %v560 = vadd.f32 %v490, %v559
  %v561 = vpop.f32.mrb[0].mxu0
  %562 = vdwg.mxu0
  %563 = vmatprep.subr.mxu0 0.0
  %564 = vmatpush1.msra.mxu0 %v85
  %565 = vmatprep.subr.mxu0 0.0
  %566 = vmatpush1.msra.mxu0 %v86
  %567 = vmatprep.subr.mxu0 0.0
  %568 = vmatpush1.msra.mxu0 %v87
  %569 = vmatprep.subr.mxu0 0.0
  %570 = vmatpush1.msra.mxu0 %v88
  %571 = vmatprep.subr.mxu0 0.0
  %572 = vmatpush1.msra.mxu0 %v89
  %573 = vmatprep.subr.mxu0 0.0
  %574 = vmatpush1.msra.mxu0 %v90
  %575 = vmatprep.subr.mxu0 0.0
  %576 = vmatpush1.msra.mxu0 %v91
  %577 = vmatprep.subr.mxu0 0.0
  %578 = vmatpush1.msra.mxu0 %v92
  %579 = vmatprep.subr.mxu0 0.0
  %580 = vmatpush1.msra.mxu0 %v93
  %581 = vmatprep.subr.mxu0 0.0
  %582 = vmatpush1.msra.mxu0 %v94
  %583 = vmatprep.subr.mxu0 0.0
  %584 = vmatpush1.msra.mxu0 %v95
  %585 = vmatprep.subr.mxu0 0.0
  %586 = vmatpush1.msra.mxu0 %v96
  %587 = vmatprep.subr.mxu0 0.0
  %588 = vmatpush1.msra.mxu0 %v97
  %589 = vmatprep.subr.mxu0 0.0
  %590 = vmatpush1.msra.mxu0 %v98
  %591 = vmatprep.subr.mxu0 0.0
  %592 = vmatpush1.msra.mxu0 %v99
  %593 = vmatprep.subr.mxu0 0.0
  %594 = vmatpush1.msra.mxu0 %v100
  %595 = vmatprep.subr.mxu0 0.0
  %596 = vmatpush1.msra.mxu0 %v101
  %597 = vmatprep.subr.mxu0 0.0
  %598 = vmatpush1.msra.mxu0 %v102
  %599 = vmatprep.subr.mxu0 0.0
  %600 = vmatpush1.msra.mxu0 %v103
  %601 = vmatprep.subr.mxu0 0.0
  %602 = vmatpush1.msra.mxu0 %v104
  %603 = vmatprep.subr.mxu0 0.0
  %604 = vmatpush1.msra.mxu0 %v105
  %605 = vmatprep.subr.mxu0 0.0
  %606 = vmatpush1.msra.mxu0 %v106
  %607 = vmatprep.subr.mxu0 0.0
  %608 = vmatpush1.msra.mxu0 %v107
  %609 = vmatprep.subr.mxu0 0.0
  %610 = vmatpush1.msra.mxu0 %v108
  %611 = vmatprep.subr.mxu0 0.0
  %612 = vmatpush1.msra.mxu0 %v109
  %613 = vmatprep.subr.mxu0 0.0
  %614 = vmatpush1.msra.mxu0 %v110
  %615 = vmatprep.subr.mxu0 0.0
  %616 = vmatpush1.msra.mxu0 %v111
  %617 = vmatprep.subr.mxu0 0.0
  %618 = vmatpush1.msra.mxu0 %v112
  %619 = vmatprep.subr.mxu0 0.0
  %620 = vmatpush1.msra.mxu0 %v113
  %621 = vmatprep.subr.mxu0 0.0
  %622 = vmatpush1.msra.mxu0 %v114
  %623 = vmatprep.subr.mxu0 0.0
  %624 = vmatpush1.msra.mxu0 %v115
  %625 = vmatprep.subr.mxu0 0.0
  %626 = vmatpush1.msra.mxu0 %v116
  %627 = vmatprep.mubr.f32.mxu0 %v410
  %628 = vmatmul.mubr.f32.gmra.mrb[0].mxu0 %v396
  %v629 = vpop.f32.mrb[0].mxu0
  %v630 = vadd.f32 %v560, %v629
  %v631 = vpop.f32.mrb[0].mxu0
  %632 = vdwg.mxu0
  %633 = vmatprep.subr.mxu0 0.0
  %634 = vmatpush1.msra.mxu0 %v117
  %635 = vmatprep.subr.mxu0 0.0
  %636 = vmatpush1.msra.mxu0 %v118
  %637 = vmatprep.subr.mxu0 0.0
  %638 = vmatpush1.msra.mxu0 %v119
  %639 = vmatprep.subr.mxu0 0.0
  %640 = vmatpush1.msra.mxu0 %v120
  %641 = vmatprep.subr.mxu0 0.0
  %642 = vmatpush1.msra.mxu0 %v121
  %643 = vmatprep.subr.mxu0 0.0
  %644 = vmatpush1.msra.mxu0 %v122
  %645 = vmatprep.subr.mxu0 0.0
  %646 = vmatpush1.msra.mxu0 %v123
  %647 = vmatprep.subr.mxu0 0.0
  %648 = vmatpush1.msra.mxu0 %v124
  %649 = vmatprep.subr.mxu0 0.0
  %650 = vmatpush1.msra.mxu0 %v125
  %651 = vmatprep.subr.mxu0 0.0
  %652 = vmatpush1.msra.mxu0 %v126
  %653 = vmatprep.subr.mxu0 0.0
  %654 = vmatpush1.msra.mxu0 %v127
  %655 = vmatprep.subr.mxu0 0.0
  %656 = vmatpush1.msra.mxu0 %v128
  %657 = vmatprep.subr.mxu0 0.0
  %658 = vmatpush1.msra.mxu0 %v129
  %659 = vmatprep.subr.mxu0 0.0
  %660 = vmatpush1.msra.mxu0 %v130
  %661 = vmatprep.subr.mxu0 0.0
  %662 = vmatpush1.msra.mxu0 %v131
  %663 = vmatprep.subr.mxu0 0.0
  %664 = vmatpush1.msra.mxu0 %v132
  %665 = vmatprep.subr.mxu0 0.0
  %666 = vmatpush1.msra.mxu0 %v133
  %667 = vmatprep.subr.mxu0 0.0
  %668 = vmatpush1.msra.mxu0 %v134
  %669 = vmatprep.subr.mxu0 0.0
  %670 = vmatpush1.msra.mxu0 %v135
  %671 = vmatprep.subr.mxu0 0.0
  %672 = vmatpush1.msra.mxu0 %v136
  %673 = vmatprep.subr.mxu0 0.0
  %674 = vmatpush1.msra.mxu0 %v137
  %675 = vmatprep.subr.mxu0 0.0
  %676 = vmatpush1.msra.mxu0 %v138
  %677 = vmatprep.subr.mxu0 0.0
  %678 = vmatpush1.msra.mxu0 %v139
  %679 = vmatprep.subr.mxu0 0.0
  %680 = vmatpush1.msra.mxu0 %v140
  %681 = vmatprep.subr.mxu0 0.0
  %682 = vmatpush1.msra.mxu0 %v141
  %683 = vmatprep.subr.mxu0 0.0
  %684 = vmatpush1.msra.mxu0 %v142
  %685 = vmatprep.subr.mxu0 0.0
  %686 = vmatpush1.msra.mxu0 %v143
  %687 = vmatprep.subr.mxu0 0.0
  %688 = vmatpush1.msra.mxu0 %v144
  %689 = vmatprep.subr.mxu0 0.0
  %690 = vmatpush1.msra.mxu0 %v145
  %691 = vmatprep.subr.mxu0 0.0
  %692 = vmatpush1.msra.mxu0 %v146
  %693 = vmatprep.subr.mxu0 0.0
  %694 = vmatpush1.msra.mxu0 %v147
  %695 = vmatprep.subr.mxu0 0.0
  %696 = vmatpush1.msra.mxu0 %v148
  %697 = vmatprep.mubr.f32.mxu0 %v411
  %698 = vmatmul.mubr.f32.gmra.mrb[0].mxu0 %v397
  %v699 = vpop.f32.mrb[0].mxu0
  %v700 = vadd.f32 %v630, %v699
  %v701 = vpop.f32.mrb[0].mxu0
  %702 = vdwg.mxu0
  %703 = vmatprep.subr.mxu0 0.0
  %704 = vmatpush1.msra.mxu0 %v149
  %705 = vmatprep.subr.mxu0 0.0
  %706 = vmatpush1.msra.mxu0 %v150
  %707 = vmatprep.subr.mxu0 0.0
  %708 = vmatpush1.msra.mxu0 %v151
  %709 = vmatprep.subr.mxu0 0.0
  %710 = vmatpush1.msra.mxu0 %v152
  %711 = vmatprep.subr.mxu0 0.0
  %712 = vmatpush1.msra.mxu0 %v153
  %713 = vmatprep.subr.mxu0 0.0
  %714 = vmatpush1.msra.mxu0 %v154
  %715 = vmatprep.subr.mxu0 0.0
  %716 = vmatpush1.msra.mxu0 %v155
  %717 = vmatprep.subr.mxu0 0.0
  %718 = vmatpush1.msra.mxu0 %v156
  %719 = vmatprep.subr.mxu0 0.0
  %720 = vmatpush1.msra.mxu0 %v157
  %721 = vmatprep.subr.mxu0 0.0
  %722 = vmatpush1.msra.mxu0 %v158
  %723 = vmatprep.subr.mxu0 0.0
  %724 = vmatpush1.msra.mxu0 %v159
  %725 = vmatprep.subr.mxu0 0.0
  %726 = vmatpush1.msra.mxu0 %v160
  %727 = vmatprep.subr.mxu0 0.0
  %728 = vmatpush1.msra.mxu0 %v161
  %729 = vmatprep.subr.mxu0 0.0
  %730 = vmatpush1.msra.mxu0 %v162
  %731 = vmatprep.subr.mxu0 0.0
  %732 = vmatpush1.msra.mxu0 %v163
  %733 = vmatprep.subr.mxu0 0.0
  %734 = vmatpush1.msra.mxu0 %v164
  %735 = vmatprep.subr.mxu0 0.0
  %736 = vmatpush1.msra.mxu0 %v165
  %737 = vmatprep.subr.mxu0 0.0
  %738 = vmatpush1.msra.mxu0 %v166
  %739 = vmatprep.subr.mxu0 0.0
  %740 = vmatpush1.msra.mxu0 %v167
  %741 = vmatprep.subr.mxu0 0.0
  %742 = vmatpush1.msra.mxu0 %v168
  %743 = vmatprep.subr.mxu0 0.0
  %744 = vmatpush1.msra.mxu0 %v169
  %745 = vmatprep.subr.mxu0 0.0
  %746 = vmatpush1.msra.mxu0 %v170
  %747 = vmatprep.subr.mxu0 0.0
  %748 = vmatpush1.msra.mxu0 %v171
  %749 = vmatprep.subr.mxu0 0.0
  %750 = vmatpush1.msra.mxu0 %v172
  %751 = vmatprep.subr.mxu0 0.0
  %752 = vmatpush1.msra.mxu0 %v173
  %753 = vmatprep.subr.mxu0 0.0
  %754 = vmatpush1.msra.mxu0 %v174
  %755 = vmatprep.subr.mxu0 0.0
  %756 = vmatpush1.msra.mxu0 %v175
  %757 = vmatprep.subr.mxu0 0.0
  %758 = vmatpush1.msra.mxu0 %v176
  %759 = vmatprep.subr.mxu0 0.0
  %760 = vmatpush1.msra.mxu0 %v177
  %761 = vmatprep.subr.mxu0 0.0
  %762 = vmatpush1.msra.mxu0 %v178
  %763 = vmatprep.subr.mxu0 0.0
  %764 = vmatpush1.msra.mxu0 %v179
  %765 = vmatprep.subr.mxu0 0.0
  %766 = vmatpush1.msra.mxu0 %v180
  %767 = vmatprep.mubr.f32.mxu0 %v412
  %768 = vmatmul.mubr.f32.gmra.mrb[0].mxu0 %v398
  %v769 = vpop.f32.mrb[0].mxu0
  %v770 = vadd.f32 %v700, %v769
  %v771 = vpop.f32.mrb[0].mxu0
  %772 = vdwg.mxu0
  %773 = vmatprep.subr.mxu0 0.0
  %774 = vmatpush1.msra.mxu0 %v181
  %775 = vmatprep.subr.mxu0 0.0
  %776 = vmatpush1.msra.mxu0 %v182
  %777 = vmatprep.subr.mxu0 0.0
  %778 = vmatpush1.msra.mxu0 %v183
  %779 = vmatprep.subr.mxu0 0.0
  %780 = vmatpush1.msra.mxu0 %v184
  %781 = vmatprep.subr.mxu0 0.0
  %782 = vmatpush1.msra.mxu0 %v185
  %783 = vmatprep.subr.mxu0 0.0
  %784 = vmatpush1.msra.mxu0 %v186
  %785 = vmatprep.subr.mxu0 0.0
  %786 = vmatpush1.msra.mxu0 %v187
  %787 = vmatprep.subr.mxu0 0.0
  %788 = vmatpush1.msra.mxu0 %v188
  %789 = vmatprep.subr.mxu0 0.0
  %790 = vmatpush1.msra.mxu0 %v189
  %791 = vmatprep.subr.mxu0 0.0
  %792 = vmatpush1.msra.mxu0 %v190
  %793 = vmatprep.subr.mxu0 0.0
  %794 = vmatpush1.msra.mxu0 %v191
  %795 = vmatprep.subr.mxu0 0.0
  %796 = vmatpush1.msra.mxu0 %v192
  %797 = vmatprep.subr.mxu0 0.0
  %798 = vmatpush1.msra.mxu0 %v193
  %799 = vmatprep.subr.mxu0 0.0
  %800 = vmatpush1.msra.mxu0 %v194
  %801 = vmatprep.subr.mxu0 0.0
  %802 = vmatpush1.msra.mxu0 %v195
  %803 = vmatprep.subr.mxu0 0.0
  %804 = vmatpush1.msra.mxu0 %v196
  %805 = vmatprep.subr.mxu0 0.0
  %806 = vmatpush1.msra.mxu0 %v197
  %807 = vmatprep.subr.mxu0 0.0
  %808 = vmatpush1.msra.mxu0 %v198
  %809 = vmatprep.subr.mxu0 0.0
  %810 = vmatpush1.msra.mxu0 %v199
  %811 = vmatprep.subr.mxu0 0.0
  %812 = vmatpush1.msra.mxu0 %v200
  %813 = vmatprep.subr.mxu0 0.0
  %814 = vmatpush1.msra.mxu0 %v201
  %815 = vmatprep.subr.mxu0 0.0
  %816 = vmatpush1.msra.mxu0 %v202
  %817 = vmatprep.subr.mxu0 0.0
  %818 = vmatpush1.msra.mxu0 %v203
  %819 = vmatprep.subr.mxu0 0.0
  %820 = vmatpush1.msra.mxu0 %v204
  %821 = vmatprep.subr.mxu0 0.0
  %822 = vmatpush1.msra.mxu0 %v205
  %823 = vmatprep.subr.mxu0 0.0
  %824 = vmatpush1.msra.mxu0 %v206
  %825 = vmatprep.subr.mxu0 0.0
  %826 = vmatpush1.msra.mxu0 %v207
  %827 = vmatprep.subr.mxu0 0.0
  %828 = vmatpush1.msra.mxu0 %v208
  %829 = vmatprep.subr.mxu0 0.0
  %830 = vmatpush1.msra.mxu0 %v209
  %831 = vmatprep.subr.mxu0 0.0
  %832 = vmatpush1.msra.mxu0 %v210
  %833 = vmatprep.subr.mxu0 0.0
  %834 = vmatpush1.msra.mxu0 %v211
  %835 = vmatprep.subr.mxu0 0.0
  %836 = vmatpush1.msra.mxu0 %v212
  %837 = vmatprep.mubr.f32.mxu0 %v413
  %838 = vmatmul.mubr.f32.gmra.mrb[0].mxu0 %v399
  %v839 = vpop.f32.mrb[0].mxu0
  %v840 = vadd.f32 %v770, %v839
  %v841 = vpop.f32.mrb[0].mxu0
  %842 = vdwg.mxu0
  %843 = vmatprep.subr.mxu0 0.0
  %844 = vmatpush1.msra.mxu0 %v213
  %845 = vmatprep.subr.mxu0 0.0
  %846 = vmatpush1.msra.mxu0 %v214
  %847 = vmatprep.subr.mxu0 0.0
  %848 = vmatpush1.msra.mxu0 %v215
  %849 = vmatprep.subr.mxu0 0.0
  %850 = vmatpush1.msra.mxu0 %v216
  %851 = vmatprep.subr.mxu0 0.0
  %852 = vmatpush1.msra.mxu0 %v217
  %853 = vmatprep.subr.mxu0 0.0
  %854 = vmatpush1.msra.mxu0 %v218
  %855 = vmatprep.subr.mxu0 0.0
  %856 = vmatpush1.msra.mxu0 %v219
  %857 = vmatprep.subr.mxu0 0.0
  %858 = vmatpush1.msra.mxu0 %v220
  %859 = vmatprep.subr.mxu0 0.0
  %860 = vmatpush1.msra.mxu0 0.0
  %861 = vmatprep.subr.mxu0 0.0
  %862 = vmatpush1.msra.mxu0 0.0
  %863 = vmatprep.subr.mxu0 0.0
  %864 = vmatpush1.msra.mxu0 0.0
  %865 = vmatprep.subr.mxu0 0.0
  %866 = vmatpush1.msra.mxu0 0.0
  %867 = vmatprep.subr.mxu0 0.0
  %868 = vmatpush1.msra.mxu0 0.0
  %869 = vmatprep.subr.mxu0 0.0
  %870 = vmatpush1.msra.mxu0 0.0
  %871 = vmatprep.subr.mxu0 0.0
  %872 = vmatpush1.msra.mxu0 0.0
  %873 = vmatprep.subr.mxu0 0.0
  %874 = vmatpush1.msra.mxu0 0.0
  %875 = vmatprep.subr.mxu0 0.0
  %876 = vmatpush1.msra.mxu0 0.0
  %877 = vmatprep.subr.mxu0 0.0
  %878 = vmatpush1.msra.mxu0 0.0
  %879 = vmatprep.subr.mxu0 0.0
  %880 = vmatpush1.msra.mxu0 0.0
  %881 = vmatprep.subr.mxu0 0.0
  %882 = vmatpush1.msra.mxu0 0.0
  %883 = vmatprep.subr.mxu0 0.0
  %884 = vmatpush1.msra.mxu0 0.0
  %885 = vmatprep.subr.mxu0 0.0
  %886 = vmatpush1.msra.mxu0 0.0
  %887 = vmatprep.subr.mxu0 0.0
  %888 = vmatpush1.msra.mxu0 0.0
  %889 = vmatprep.subr.mxu0 0.0
  %890 = vmatpush1.msra.mxu0 0.0
  %891 = vmatprep.subr.mxu0 0.0
  %892 = vmatpush1.msra.mxu0 0.0
  %893 = vmatprep.subr.mxu0 0.0
  %894 = vmatpush1.msra.mxu0 0.0
  %895 = vmatprep.subr.mxu0 0.0
  %896 = vmatpush1.msra.mxu0 0.0
  %897 = vmatprep.subr.mxu0 0.0
  %898 = vmatpush1.msra.mxu0 0.0
  %899 = vmatprep.subr.mxu0 0.0
  %900 = vmatpush1.msra.mxu0 0.0
  %901 = vmatprep.subr.mxu0 0.0
  %902 = vmatpush1.msra.mxu0 0.0
  %903 = vmatprep.subr.mxu0 0.0
  %904 = vmatpush1.msra.mxu0 0.0
  %905 = vmatprep.subr.mxu0 0.0
  %906 = vmatpush1.msra.mxu0 0.0
  %907 = vmatprep.mubr.f32.mxu0 0.0
  %908 = vmatmul.mubr.f32.gmra.mrb[0].mxu0 %v421
  %v909 = vpop.f32.mrb[0].mxu0
  %v910 = vadd.f32 %v840, %v909
  %v911 = vpop.f32.mrb[0].mxu0
  %912 = vdwg.mxu0
  %v913 = vsel %vm420, %v368, 0
  %915 = vmatprep.subr.mxu0 0.0
  %916 = vmatpush1.msra.mxu0 %v21
  %917 = vmatprep.subr.mxu0 0.0
  %918 = vmatpush1.msra.mxu0 %v22
  %919 = vmatprep.subr.mxu0 0.0
  %920 = vmatpush1.msra.mxu0 %v23
  %921 = vmatprep.subr.mxu0 0.0
  %922 = vmatpush1.msra.mxu0 %v24
  %923 = vmatprep.subr.mxu0 0.0
  %924 = vmatpush1.msra.mxu0 %v25
  %925 = vmatprep.subr.mxu0 0.0
  %926 = vmatpush1.msra.mxu0 %v26
  %927 = vmatprep.subr.mxu0 0.0
  %928 = vmatpush1.msra.mxu0 %v27
  %929 = vmatprep.subr.mxu0 0.0
  %930 = vmatpush1.msra.mxu0 %v28
  %931 = vmatprep.subr.mxu0 0.0
  %932 = vmatpush1.msra.mxu0 %v29
  %933 = vmatprep.subr.mxu0 0.0
  %934 = vmatpush1.msra.mxu0 %v30
  %935 = vmatprep.subr.mxu0 0.0
  %936 = vmatpush1.msra.mxu0 %v31
  %937 = vmatprep.subr.mxu0 0.0
  %938 = vmatpush1.msra.mxu0 %v32
  %939 = vmatprep.subr.mxu0 0.0
  %940 = vmatpush1.msra.mxu0 %v33
  %941 = vmatprep.subr.mxu0 0.0
  %942 = vmatpush1.msra.mxu0 %v34
  %943 = vmatprep.subr.mxu0 0.0
  %944 = vmatpush1.msra.mxu0 %v35
  %945 = vmatprep.subr.mxu0 0.0
  %946 = vmatpush1.msra.mxu0 %v36
  %947 = vmatprep.subr.mxu0 0.0
  %948 = vmatpush1.msra.mxu0 %v37
  %949 = vmatprep.subr.mxu0 0.0
  %950 = vmatpush1.msra.mxu0 %v38
  %951 = vmatprep.subr.mxu0 0.0
  %952 = vmatpush1.msra.mxu0 %v39
  %953 = vmatprep.subr.mxu0 0.0
  %954 = vmatpush1.msra.mxu0 %v40
  %955 = vmatprep.subr.mxu0 0.0
  %956 = vmatpush1.msra.mxu0 %v41
  %957 = vmatprep.subr.mxu0 0.0
  %958 = vmatpush1.msra.mxu0 %v42
  %959 = vmatprep.subr.mxu0 0.0
  %960 = vmatpush1.msra.mxu0 %v43
  %961 = vmatprep.subr.mxu0 0.0
  %962 = vmatpush1.msra.mxu0 %v44
  %963 = vmatprep.subr.mxu0 0.0
  %964 = vmatpush1.msra.mxu0 %v45
  %965 = vmatprep.subr.mxu0 0.0
  %966 = vmatpush1.msra.mxu0 %v46
  %967 = vmatprep.subr.mxu0 0.0
  %968 = vmatpush1.msra.mxu0 %v47
  %969 = vmatprep.subr.mxu0 0.0
  %970 = vmatpush1.msra.mxu0 %v48
  %971 = vmatprep.subr.mxu0 0.0
  %972 = vmatpush1.msra.mxu0 %v49
  %973 = vmatprep.subr.mxu0 0.0
  %974 = vmatpush1.msra.mxu0 %v50
  %975 = vmatprep.subr.mxu0 0.0
  %976 = vmatpush1.msra.mxu0 %v51
  %977 = vmatprep.subr.mxu0 0.0
  %978 = vmatpush1.msra.mxu0 %v52
  %979 = vmatprep.mubr.f32.mxu0 %v357
  %980 = vmatmul.mubr.f32.gmra.mrb[0].mxu0 %v356
  %v981 = vpop.f32.mrb[0].mxu0
  %v982 = vadd.f32 %v910, %v981
  %v983 = vpop.f32.mrb[0].mxu0
  %984 = vdwg.mxu0
  %985 = vmatprep.subr.mxu0 0.0
  %986 = vmatpush1.msra.mxu0 %v53
  %987 = vmatprep.subr.mxu0 0.0
  %988 = vmatpush1.msra.mxu0 %v54
  %989 = vmatprep.subr.mxu0 0.0
  %990 = vmatpush1.msra.mxu0 %v55
  %991 = vmatprep.subr.mxu0 0.0
  %992 = vmatpush1.msra.mxu0 %v56
  %993 = vmatprep.subr.mxu0 0.0
  %994 = vmatpush1.msra.mxu0 %v57
  %995 = vmatprep.subr.mxu0 0.0
  %996 = vmatpush1.msra.mxu0 %v58
  %997 = vmatprep.subr.mxu0 0.0
  %998 = vmatpush1.msra.mxu0 %v59
  %999 = vmatprep.subr.mxu0 0.0
  %1000 = vmatpush1.msra.mxu0 %v60
  %1001 = vmatprep.subr.mxu0 0.0
  %1002 = vmatpush1.msra.mxu0 %v61
  %1003 = vmatprep.subr.mxu0 0.0
  %1004 = vmatpush1.msra.mxu0 %v62
  %1005 = vmatprep.subr.mxu0 0.0
  %1006 = vmatpush1.msra.mxu0 %v63
  %1007 = vmatprep.subr.mxu0 0.0
  %1008 = vmatpush1.msra.mxu0 %v64
  %1009 = vmatprep.subr.mxu0 0.0
  %1010 = vmatpush1.msra.mxu0 %v65
  %1011 = vmatprep.subr.mxu0 0.0
  %1012 = vmatpush1.msra.mxu0 %v66
  %1013 = vmatprep.subr.mxu0 0.0
  %1014 = vmatpush1.msra.mxu0 %v67
  %1015 = vmatprep.subr.mxu0 0.0
  %1016 = vmatpush1.msra.mxu0 %v68
  %1017 = vmatprep.subr.mxu0 0.0
  %1018 = vmatpush1.msra.mxu0 %v69
  %1019 = vmatprep.subr.mxu0 0.0
  %1020 = vmatpush1.msra.mxu0 %v70
  %1021 = vmatprep.subr.mxu0 0.0
  %1022 = vmatpush1.msra.mxu0 %v71
  %1023 = vmatprep.subr.mxu0 0.0
  %1024 = vmatpush1.msra.mxu0 %v72
  %1025 = vmatprep.subr.mxu0 0.0
  %1026 = vmatpush1.msra.mxu0 %v73
  %1027 = vmatprep.subr.mxu0 0.0
  %1028 = vmatpush1.msra.mxu0 %v74
  %1029 = vmatprep.subr.mxu0 0.0
  %1030 = vmatpush1.msra.mxu0 %v75
  %1031 = vmatprep.subr.mxu0 0.0
  %1032 = vmatpush1.msra.mxu0 %v76
  %1033 = vmatprep.subr.mxu0 0.0
  %1034 = vmatpush1.msra.mxu0 %v77
  %1035 = vmatprep.subr.mxu0 0.0
  %1036 = vmatpush1.msra.mxu0 %v78
  %1037 = vmatprep.subr.mxu0 0.0
  %1038 = vmatpush1.msra.mxu0 %v79
  %1039 = vmatprep.subr.mxu0 0.0
  %1040 = vmatpush1.msra.mxu0 %v80
  %1041 = vmatprep.subr.mxu0 0.0
  %1042 = vmatpush1.msra.mxu0 %v81
  %1043 = vmatprep.subr.mxu0 0.0
  %1044 = vmatpush1.msra.mxu0 %v82
  %1045 = vmatprep.subr.mxu0 0.0
  %1046 = vmatpush1.msra.mxu0 %v83
  %1047 = vmatprep.subr.mxu0 0.0
  %1048 = vmatpush1.msra.mxu0 %v84
  %1049 = vmatprep.mubr.f32.mxu0 %v359
  %1050 = vmatmul.mubr.f32.gmra.mrb[0].mxu0 %v358
  %v1051 = vpop.f32.mrb[0].mxu0
  %v1052 = vadd.f32 %v982, %v1051
  %v1053 = vpop.f32.mrb[0].mxu0
  %1054 = vdwg.mxu0
  %1055 = vmatprep.subr.mxu0 0.0
  %1056 = vmatpush1.msra.mxu0 %v85
  %1057 = vmatprep.subr.mxu0 0.0
  %1058 = vmatpush1.msra.mxu0 %v86
  %1059 = vmatprep.subr.mxu0 0.0
  %1060 = vmatpush1.msra.mxu0 %v87
  %1061 = vmatprep.subr.mxu0 0.0
  %1062 = vmatpush1.msra.mxu0 %v88
  %1063 = vmatprep.subr.mxu0 0.0
  %1064 = vmatpush1.msra.mxu0 %v89
  %1065 = vmatprep.subr.mxu0 0.0
  %1066 = vmatpush1.msra.mxu0 %v90
  %1067 = vmatprep.subr.mxu0 0.0
  %1068 = vmatpush1.msra.mxu0 %v91
  %1069 = vmatprep.subr.mxu0 0.0
  %1070 = vmatpush1.msra.mxu0 %v92
  %1071 = vmatprep.subr.mxu0 0.0
  %1072 = vmatpush1.msra.mxu0 %v93
  %1073 = vmatprep.subr.mxu0 0.0
  %1074 = vmatpush1.msra.mxu0 %v94
  %1075 = vmatprep.subr.mxu0 0.0
  %1076 = vmatpush1.msra.mxu0 %v95
  %1077 = vmatprep.subr.mxu0 0.0
  %1078 = vmatpush1.msra.mxu0 %v96
  %1079 = vmatprep.subr.mxu0 0.0
  %1080 = vmatpush1.msra.mxu0 %v97
  %1081 = vmatprep.subr.mxu0 0.0
  %1082 = vmatpush1.msra.mxu0 %v98
  %1083 = vmatprep.subr.mxu0 0.0
  %1084 = vmatpush1.msra.mxu0 %v99
  %1085 = vmatprep.subr.mxu0 0.0
  %1086 = vmatpush1.msra.mxu0 %v100
  %1087 = vmatprep.subr.mxu0 0.0
  %1088 = vmatpush1.msra.mxu0 %v101
  %1089 = vmatprep.subr.mxu0 0.0
  %1090 = vmatpush1.msra.mxu0 %v102
  %1091 = vmatprep.subr.mxu0 0.0
  %1092 = vmatpush1.msra.mxu0 %v103
  %1093 = vmatprep.subr.mxu0 0.0
  %1094 = vmatpush1.msra.mxu0 %v104
  %1095 = vmatprep.subr.mxu0 0.0
  %1096 = vmatpush1.msra.mxu0 %v105
  %1097 = vmatprep.subr.mxu0 0.0
  %1098 = vmatpush1.msra.mxu0 %v106
  %1099 = vmatprep.subr.mxu0 0.0
  %1100 = vmatpush1.msra.mxu0 %v107
  %1101 = vmatprep.subr.mxu0 0.0
  %1102 = vmatpush1.msra.mxu0 %v108
  %1103 = vmatprep.subr.mxu0 0.0
  %1104 = vmatpush1.msra.mxu0 %v109
  %1105 = vmatprep.subr.mxu0 0.0
  %1106 = vmatpush1.msra.mxu0 %v110
  %1107 = vmatprep.subr.mxu0 0.0
  %1108 = vmatpush1.msra.mxu0 %v111
  %1109 = vmatprep.subr.mxu0 0.0
  %1110 = vmatpush1.msra.mxu0 %v112
  %1111 = vmatprep.subr.mxu0 0.0
  %1112 = vmatpush1.msra.mxu0 %v113
  %1113 = vmatprep.subr.mxu0 0.0
  %1114 = vmatpush1.msra.mxu0 %v114
  %1115 = vmatprep.subr.mxu0 0.0
  %1116 = vmatpush1.msra.mxu0 %v115
  %1117 = vmatprep.subr.mxu0 0.0
  %1118 = vmatpush1.msra.mxu0 %v116
  %1119 = vmatprep.mubr.f32.mxu0 %v361
  %1120 = vmatmul.mubr.f32.gmra.mrb[0].mxu0 %v360
  %v1121 = vpop.f32.mrb[0].mxu0
  %v1122 = vadd.f32 %v1052, %v1121
  %v1123 = vpop.f32.mrb[0].mxu0
  %1124 = vdwg.mxu0
  %1125 = vmatprep.subr.mxu0 0.0
  %1126 = vmatpush1.msra.mxu0 %v117
  %1127 = vmatprep.subr.mxu0 0.0
  %1128 = vmatpush1.msra.mxu0 %v118
  %1129 = vmatprep.subr.mxu0 0.0
  %1130 = vmatpush1.msra.mxu0 %v119
  %1131 = vmatprep.subr.mxu0 0.0
  %1132 = vmatpush1.msra.mxu0 %v120
  %1133 = vmatprep.subr.mxu0 0.0
  %1134 = vmatpush1.msra.mxu0 %v121
  %1135 = vmatprep.subr.mxu0 0.0
  %1136 = vmatpush1.msra.mxu0 %v122
  %1137 = vmatprep.subr.mxu0 0.0
  %1138 = vmatpush1.msra.mxu0 %v123
  %1139 = vmatprep.subr.mxu0 0.0
  %1140 = vmatpush1.msra.mxu0 %v124
  %1141 = vmatprep.subr.mxu0 0.0
  %1142 = vmatpush1.msra.mxu0 %v125
  %1143 = vmatprep.subr.mxu0 0.0
  %1144 = vmatpush1.msra.mxu0 %v126
  %1145 = vmatprep.subr.mxu0 0.0
  %1146 = vmatpush1.msra.mxu0 %v127
  %1147 = vmatprep.subr.mxu0 0.0
  %1148 = vmatpush1.msra.mxu0 %v128
  %1149 = vmatprep.subr.mxu0 0.0
  %1150 = vmatpush1.msra.mxu0 %v129
  %1151 = vmatprep.subr.mxu0 0.0
  %1152 = vmatpush1.msra.mxu0 %v130
  %1153 = vmatprep.subr.mxu0 0.0
  %1154 = vmatpush1.msra.mxu0 %v131
  %1155 = vmatprep.subr.mxu0 0.0
  %1156 = vmatpush1.msra.mxu0 %v132
  %1157 = vmatprep.subr.mxu0 0.0
  %1158 = vmatpush1.msra.mxu0 %v133
  %1159 = vmatprep.subr.mxu0 0.0
  %1160 = vmatpush1.msra.mxu0 %v134
  %1161 = vmatprep.subr.mxu0 0.0
  %1162 = vmatpush1.msra.mxu0 %v135
  %1163 = vmatprep.subr.mxu0 0.0
  %1164 = vmatpush1.msra.mxu0 %v136
  %1165 = vmatprep.subr.mxu0 0.0
  %1166 = vmatpush1.msra.mxu0 %v137
  %1167 = vmatprep.subr.mxu0 0.0
  %1168 = vmatpush1.msra.mxu0 %v138
  %1169 = vmatprep.subr.mxu0 0.0
  %1170 = vmatpush1.msra.mxu0 %v139
  %1171 = vmatprep.subr.mxu0 0.0
  %1172 = vmatpush1.msra.mxu0 %v140
  %1173 = vmatprep.subr.mxu0 0.0
  %1174 = vmatpush1.msra.mxu0 %v141
  %1175 = vmatprep.subr.mxu0 0.0
  %1176 = vmatpush1.msra.mxu0 %v142
  %1177 = vmatprep.subr.mxu0 0.0
  %1178 = vmatpush1.msra.mxu0 %v143
  %1179 = vmatprep.subr.mxu0 0.0
  %1180 = vmatpush1.msra.mxu0 %v144
  %1181 = vmatprep.subr.mxu0 0.0
  %1182 = vmatpush1.msra.mxu0 %v145
  %1183 = vmatprep.subr.mxu0 0.0
  %1184 = vmatpush1.msra.mxu0 %v146
  %1185 = vmatprep.subr.mxu0 0.0
  %1186 = vmatpush1.msra.mxu0 %v147
  %1187 = vmatprep.subr.mxu0 0.0
  %1188 = vmatpush1.msra.mxu0 %v148
  %1189 = vmatprep.mubr.f32.mxu0 %v363
  %1190 = vmatmul.mubr.f32.gmra.mrb[0].mxu0 %v362
  %v1191 = vpop.f32.mrb[0].mxu0
  %v1192 = vadd.f32 %v1122, %v1191
  %v1193 = vpop.f32.mrb[0].mxu0
  %1194 = vdwg.mxu0
  %1195 = vmatprep.subr.mxu0 0.0
  %1196 = vmatpush1.msra.mxu0 %v149
  %1197 = vmatprep.subr.mxu0 0.0
  %1198 = vmatpush1.msra.mxu0 %v150
  %1199 = vmatprep.subr.mxu0 0.0
  %1200 = vmatpush1.msra.mxu0 %v151
  %1201 = vmatprep.subr.mxu0 0.0
  %1202 = vmatpush1.msra.mxu0 %v152
  %1203 = vmatprep.subr.mxu0 0.0
  %1204 = vmatpush1.msra.mxu0 %v153
  %1205 = vmatprep.subr.mxu0 0.0
  %1206 = vmatpush1.msra.mxu0 %v154
  %1207 = vmatprep.subr.mxu0 0.0
  %1208 = vmatpush1.msra.mxu0 %v155
  %1209 = vmatprep.subr.mxu0 0.0
  %1210 = vmatpush1.msra.mxu0 %v156
  %1211 = vmatprep.subr.mxu0 0.0
  %1212 = vmatpush1.msra.mxu0 %v157
  %1213 = vmatprep.subr.mxu0 0.0
  %1214 = vmatpush1.msra.mxu0 %v158
  %1215 = vmatprep.subr.mxu0 0.0
  %1216 = vmatpush1.msra.mxu0 %v159
  %1217 = vmatprep.subr.mxu0 0.0
  %1218 = vmatpush1.msra.mxu0 %v160
  %1219 = vmatprep.subr.mxu0 0.0
  %1220 = vmatpush1.msra.mxu0 %v161
  %1221 = vmatprep.subr.mxu0 0.0
  %1222 = vmatpush1.msra.mxu0 %v162
  %1223 = vmatprep.subr.mxu0 0.0
  %1224 = vmatpush1.msra.mxu0 %v163
  %1225 = vmatprep.subr.mxu0 0.0
  %1226 = vmatpush1.msra.mxu0 %v164
  %1227 = vmatprep.subr.mxu0 0.0
  %1228 = vmatpush1.msra.mxu0 %v165
  %1229 = vmatprep.subr.mxu0 0.0
  %1230 = vmatpush1.msra.mxu0 %v166
  %1231 = vmatprep.subr.mxu0 0.0
  %1232 = vmatpush1.msra.mxu0 %v167
  %1233 = vmatprep.subr.mxu0 0.0
  %1234 = vmatpush1.msra.mxu0 %v168
  %1235 = vmatprep.subr.mxu0 0.0
  %1236 = vmatpush1.msra.mxu0 %v169
  %1237 = vmatprep.subr.mxu0 0.0
  %1238 = vmatpush1.msra.mxu0 %v170
  %1239 = vmatprep.subr.mxu0 0.0
  %1240 = vmatpush1.msra.mxu0 %v171
  %1241 = vmatprep.subr.mxu0 0.0
  %1242 = vmatpush1.msra.mxu0 %v172
  %1243 = vmatprep.subr.mxu0 0.0
  %1244 = vmatpush1.msra.mxu0 %v173
  %1245 = vmatprep.subr.mxu0 0.0
  %1246 = vmatpush1.msra.mxu0 %v174
  %1247 = vmatprep.subr.mxu0 0.0
  %1248 = vmatpush1.msra.mxu0 %v175
  %1249 = vmatprep.subr.mxu0 0.0
  %1250 = vmatpush1.msra.mxu0 %v176
  %1251 = vmatprep.subr.mxu0 0.0
  %1252 = vmatpush1.msra.mxu0 %v177
  %1253 = vmatprep.subr.mxu0 0.0
  %1254 = vmatpush1.msra.mxu0 %v178
  %1255 = vmatprep.subr.mxu0 0.0
  %1256 = vmatpush1.msra.mxu0 %v179
  %1257 = vmatprep.subr.mxu0 0.0
  %1258 = vmatpush1.msra.mxu0 %v180
  %1259 = vmatprep.mubr.f32.mxu0 %v365
  %1260 = vmatmul.mubr.f32.gmra.mrb[0].mxu0 %v364
  %v1261 = vpop.f32.mrb[0].mxu0
  %v1262 = vadd.f32 %v1192, %v1261
  %v1263 = vpop.f32.mrb[0].mxu0
  %1264 = vdwg.mxu0
  %1265 = vmatprep.subr.mxu0 0.0
  %1266 = vmatpush1.msra.mxu0 %v181
  %1267 = vmatprep.subr.mxu0 0.0
  %1268 = vmatpush1.msra.mxu0 %v182
  %1269 = vmatprep.subr.mxu0 0.0
  %1270 = vmatpush1.msra.mxu0 %v183
  %1271 = vmatprep.subr.mxu0 0.0
  %1272 = vmatpush1.msra.mxu0 %v184
  %1273 = vmatprep.subr.mxu0 0.0
  %1274 = vmatpush1.msra.mxu0 %v185
  %1275 = vmatprep.subr.mxu0 0.0
  %1276 = vmatpush1.msra.mxu0 %v186
  %1277 = vmatprep.subr.mxu0 0.0
  %1278 = vmatpush1.msra.mxu0 %v187
  %1279 = vmatprep.subr.mxu0 0.0
  %1280 = vmatpush1.msra.mxu0 %v188
  %1281 = vmatprep.subr.mxu0 0.0
  %1282 = vmatpush1.msra.mxu0 %v189
  %1283 = vmatprep.subr.mxu0 0.0
  %1284 = vmatpush1.msra.mxu0 %v190
  %1285 = vmatprep.subr.mxu0 0.0
  %1286 = vmatpush1.msra.mxu0 %v191
  %1287 = vmatprep.subr.mxu0 0.0
  %1288 = vmatpush1.msra.mxu0 %v192
  %1289 = vmatprep.subr.mxu0 0.0
  %1290 = vmatpush1.msra.mxu0 %v193
  %1291 = vmatprep.subr.mxu0 0.0
  %1292 = vmatpush1.msra.mxu0 %v194
  %1293 = vmatprep.subr.mxu0 0.0
  %1294 = vmatpush1.msra.mxu0 %v195
  %1295 = vmatprep.subr.mxu0 0.0
  %1296 = vmatpush1.msra.mxu0 %v196
  %1297 = vmatprep.subr.mxu0 0.0
  %1298 = vmatpush1.msra.mxu0 %v197
  %1299 = vmatprep.subr.mxu0 0.0
  %1300 = vmatpush1.msra.mxu0 %v198
  %1301 = vmatprep.subr.mxu0 0.0
  %1302 = vmatpush1.msra.mxu0 %v199
  %1303 = vmatprep.subr.mxu0 0.0
  %1304 = vmatpush1.msra.mxu0 %v200
  %1305 = vmatprep.subr.mxu0 0.0
  %1306 = vmatpush1.msra.mxu0 %v201
  %1307 = vmatprep.subr.mxu0 0.0
  %1308 = vmatpush1.msra.mxu0 %v202
  %1309 = vmatprep.subr.mxu0 0.0
  %1310 = vmatpush1.msra.mxu0 %v203
  %1311 = vmatprep.subr.mxu0 0.0
  %1312 = vmatpush1.msra.mxu0 %v204
  %1313 = vmatprep.subr.mxu0 0.0
  %1314 = vmatpush1.msra.mxu0 %v205
  %1315 = vmatprep.subr.mxu0 0.0
  %1316 = vmatpush1.msra.mxu0 %v206
  %1317 = vmatprep.subr.mxu0 0.0
  %1318 = vmatpush1.msra.mxu0 %v207
  %1319 = vmatprep.subr.mxu0 0.0
  %1320 = vmatpush1.msra.mxu0 %v208
  %1321 = vmatprep.subr.mxu0 0.0
  %1322 = vmatpush1.msra.mxu0 %v209
  %1323 = vmatprep.subr.mxu0 0.0
  %1324 = vmatpush1.msra.mxu0 %v210
  %1325 = vmatprep.subr.mxu0 0.0
  %1326 = vmatpush1.msra.mxu0 %v211
  %1327 = vmatprep.subr.mxu0 0.0
  %1328 = vmatpush1.msra.mxu0 %v212
  %1329 = vmatprep.mubr.f32.mxu0 %v367
  %1330 = vmatmul.mubr.f32.gmra.mrb[0].mxu0 %v366
  %v1331 = vpop.f32.mrb[0].mxu0
  %v1332 = vadd.f32 %v1262, %v1331
  %v1333 = vpop.f32.mrb[0].mxu0
  %1334 = vdwg.mxu0
  %1335 = vmatprep.subr.mxu0 0.0
  %1336 = vmatpush1.msra.mxu0 %v213
  %1337 = vmatprep.subr.mxu0 0.0
  %1338 = vmatpush1.msra.mxu0 %v214
  %1339 = vmatprep.subr.mxu0 0.0
  %1340 = vmatpush1.msra.mxu0 %v215
  %1341 = vmatprep.subr.mxu0 0.0
  %1342 = vmatpush1.msra.mxu0 %v216
  %1343 = vmatprep.subr.mxu0 0.0
  %1344 = vmatpush1.msra.mxu0 %v217
  %1345 = vmatprep.subr.mxu0 0.0
  %1346 = vmatpush1.msra.mxu0 %v218
  %1347 = vmatprep.subr.mxu0 0.0
  %1348 = vmatpush1.msra.mxu0 %v219
  %1349 = vmatprep.subr.mxu0 0.0
  %1350 = vmatpush1.msra.mxu0 %v220
  %1351 = vmatprep.subr.mxu0 0.0
  %1352 = vmatpush1.msra.mxu0 0.0
  %1353 = vmatprep.subr.mxu0 0.0
  %1354 = vmatpush1.msra.mxu0 0.0
  %1355 = vmatprep.subr.mxu0 0.0
  %1356 = vmatpush1.msra.mxu0 0.0
  %1357 = vmatprep.subr.mxu0 0.0
  %1358 = vmatpush1.msra.mxu0 0.0
  %1359 = vmatprep.subr.mxu0 0.0
  %1360 = vmatpush1.msra.mxu0 0.0
  %1361 = vmatprep.subr.mxu0 0.0
  %1362 = vmatpush1.msra.mxu0 0.0
  %1363 = vmatprep.subr.mxu0 0.0
  %1364 = vmatpush1.msra.mxu0 0.0
  %1365 = vmatprep.subr.mxu0 0.0
  %1366 = vmatpush1.msra.mxu0 0.0
  %1367 = vmatprep.subr.mxu0 0.0
  %1368 = vmatpush1.msra.mxu0 0.0
  %1369 = vmatprep.subr.mxu0 0.0
  %1370 = vmatpush1.msra.mxu0 0.0
  %1371 = vmatprep.subr.mxu0 0.0
  %1372 = vmatpush1.msra.mxu0 0.0
  %1373 = vmatprep.subr.mxu0 0.0
  %1374 = vmatpush1.msra.mxu0 0.0
  %1375 = vmatprep.subr.mxu0 0.0
  %1376 = vmatpush1.msra.mxu0 0.0
  %1377 = vmatprep.subr.mxu0 0.0
  %1378 = vmatpush1.msra.mxu0 0.0
  %1379 = vmatprep.subr.mxu0 0.0
  %1380 = vmatpush1.msra.mxu0 0.0
  %1381 = vmatprep.subr.mxu0 0.0
  %1382 = vmatpush1.msra.mxu0 0.0
  %1383 = vmatprep.subr.mxu0 0.0
  %1384 = vmatpush1.msra.mxu0 0.0
  %1385 = vmatprep.subr.mxu0 0.0
  %1386 = vmatpush1.msra.mxu0 0.0
  %1387 = vmatprep.subr.mxu0 0.0
  %1388 = vmatpush1.msra.mxu0 0.0
  %1389 = vmatprep.subr.mxu0 0.0
  %1390 = vmatpush1.msra.mxu0 0.0
  %1391 = vmatprep.subr.mxu0 0.0
  %1392 = vmatpush1.msra.mxu0 0.0
  %1393 = vmatprep.subr.mxu0 0.0
  %1394 = vmatpush1.msra.mxu0 0.0
  %1395 = vmatprep.subr.mxu0 0.0
  %1396 = vmatpush1.msra.mxu0 0.0
  %1397 = vmatprep.subr.mxu0 0.0
  %1398 = vmatpush1.msra.mxu0 0.0
  %1399 = vmatprep.mubr.f32.mxu0 0.0
  %1400 = vmatmul.mubr.f32.gmra.mrb[0].mxu0 %v913
  %v1401 = vpop.f32.mrb[0].mxu0
  %v1402 = vadd.f32 %v1332, %v1401
  %v1403 = vpop.f32.mrb[0].mxu0
  %1404 = vdwg.mxu0
  %v1405 = vmul.f32 %v1402, 0.04
  %v1406 = vxor.u32 %v1405, 2147483648
  %v1407 = vmul.f32 %v1406, 1.442695
  %v1408 = vpow.pop %v1407
  %v1409 = vadd.f32 %v1408, 1.0
  %v1410 = vrcp.pop %v1409
  %v1411 = vmul.f32 1.0, %v1410
  %v1412 = vmul.f32 %v1405, %v1411
  %v1413 = vpack.c.bf16 %v1412, %v1412
  %v1414 = vunpack.c.l.bf16 %v1413
  %v1415 = vsub.f32 %v1412, %v1414
  %v1417 = vsel %vm420, %v1415, 0
  %1419 = vmatprep.subr.mxu0 %v222
  %1420 = vmatpush1.msra.mxu0 %v221
  %1421 = vmatprep.subr.mxu0 %v235
  %1422 = vmatpush1.msra.mxu0 %v234
  %1423 = vmatprep.subr.mxu0 %v248
  %1424 = vmatpush1.msra.mxu0 %v247
  %1425 = vmatprep.subr.mxu0 %v261
  %1426 = vmatpush1.msra.mxu0 %v260
  %1427 = vmatprep.subr.mxu0 %v274
  %1428 = vmatpush1.msra.mxu0 %v273
  %1429 = vmatprep.subr.mxu0 %v287
  %1430 = vmatpush1.msra.mxu0 %v286
  %1431 = vmatprep.subr.mxu0 %v300
  %1432 = vmatpush1.msra.mxu0 %v299
  %1433 = vmatprep.subr.mxu0 %v313
  %1434 = vmatpush1.msra.mxu0 %v312
  %1435 = vmatprep.subr.mxu0 0.0
  %1436 = vmatpush1.msra.mxu0 0.0
  %1437 = vmatprep.subr.mxu0 0.0
  %1438 = vmatpush1.msra.mxu0 0.0
  %1439 = vmatprep.subr.mxu0 0.0
  %1440 = vmatpush1.msra.mxu0 0.0
  %1441 = vmatprep.subr.mxu0 0.0
  %1442 = vmatpush1.msra.mxu0 0.0
  %1443 = vmatprep.subr.mxu0 0.0
  %1444 = vmatpush1.msra.mxu0 0.0
  %1445 = vmatprep.subr.mxu0 0.0
  %1446 = vmatpush1.msra.mxu0 0.0
  %1447 = vmatprep.subr.mxu0 0.0
  %1448 = vmatpush1.msra.mxu0 0.0
  %1449 = vmatprep.subr.mxu0 0.0
  %1450 = vmatpush1.msra.mxu0 0.0
  %1451 = vmatprep.subr.mxu0 0.0
  %1452 = vmatpush1.msra.mxu0 0.0
  %1453 = vmatprep.subr.mxu0 0.0
  %1454 = vmatpush1.msra.mxu0 0.0
  %1455 = vmatprep.subr.mxu0 0.0
  %1456 = vmatpush1.msra.mxu0 0.0
  %1457 = vmatprep.subr.mxu0 0.0
  %1458 = vmatpush1.msra.mxu0 0.0
  %1459 = vmatprep.subr.mxu0 0.0
  %1460 = vmatpush1.msra.mxu0 0.0
  %1461 = vmatprep.subr.mxu0 0.0
  %1462 = vmatpush1.msra.mxu0 0.0
  %1463 = vmatprep.subr.mxu0 0.0
  %1464 = vmatpush1.msra.mxu0 0.0
  %1465 = vmatprep.subr.mxu0 0.0
  %1466 = vmatpush1.msra.mxu0 0.0
  %1467 = vmatprep.subr.mxu0 0.0
  %1468 = vmatpush1.msra.mxu0 0.0
  %1469 = vmatprep.subr.mxu0 0.0
  %1470 = vmatpush1.msra.mxu0 0.0
  %1471 = vmatprep.subr.mxu0 0.0
  %1472 = vmatpush1.msra.mxu0 0.0
  %1473 = vmatprep.subr.mxu0 0.0
  %1474 = vmatpush1.msra.mxu0 0.0
  %1475 = vmatprep.subr.mxu0 0.0
  %1476 = vmatpush1.msra.mxu0 0.0
  %1477 = vmatprep.subr.mxu0 0.0
  %1478 = vmatpush1.msra.mxu0 0.0
  %1479 = vmatprep.subr.mxu0 0.0
  %1480 = vmatpush1.msra.mxu0 0.0
  %1481 = vmatprep.subr.mxu0 0.0
  %1482 = vmatpush1.msra.mxu0 0.0
  %1483 = vmatprep.mubr.f32.mxu0 0.0
  %1484 = vmatmul.mubr.f32.gmra.mrb[0].mxu0 %v1417
  %v1485 = vpop.f32.mrb[0].mxu0
  %v1486 = vadd.f32 0.0, %v1485
  %v1487 = vpop.f32.mrb[0].mxu0
  %v1488 = vadd.f32 0.0, %v1487
  %1489 = vdwg.mxu0
  %1490 = vmatprep.subr.mxu0 %v224
  %1491 = vmatpush1.msra.mxu0 %v223
  %1492 = vmatprep.subr.mxu0 %v237
  %1493 = vmatpush1.msra.mxu0 %v236
  %1494 = vmatprep.subr.mxu0 %v250
  %1495 = vmatpush1.msra.mxu0 %v249
  %1496 = vmatprep.subr.mxu0 %v263
  %1497 = vmatpush1.msra.mxu0 %v262
  %1498 = vmatprep.subr.mxu0 %v276
  %1499 = vmatpush1.msra.mxu0 %v275
  %1500 = vmatprep.subr.mxu0 %v289
  %1501 = vmatpush1.msra.mxu0 %v288
  %1502 = vmatprep.subr.mxu0 %v302
  %1503 = vmatpush1.msra.mxu0 %v301
  %1504 = vmatprep.subr.mxu0 %v315
  %1505 = vmatpush1.msra.mxu0 %v314
  %1506 = vmatprep.subr.mxu0 0.0
  %1507 = vmatpush1.msra.mxu0 0.0
  %1508 = vmatprep.subr.mxu0 0.0
  %1509 = vmatpush1.msra.mxu0 0.0
  %1510 = vmatprep.subr.mxu0 0.0
  %1511 = vmatpush1.msra.mxu0 0.0
  %1512 = vmatprep.subr.mxu0 0.0
  %1513 = vmatpush1.msra.mxu0 0.0
  %1514 = vmatprep.subr.mxu0 0.0
  %1515 = vmatpush1.msra.mxu0 0.0
  %1516 = vmatprep.subr.mxu0 0.0
  %1517 = vmatpush1.msra.mxu0 0.0
  %1518 = vmatprep.subr.mxu0 0.0
  %1519 = vmatpush1.msra.mxu0 0.0
  %1520 = vmatprep.subr.mxu0 0.0
  %1521 = vmatpush1.msra.mxu0 0.0
  %1522 = vmatprep.subr.mxu0 0.0
  %1523 = vmatpush1.msra.mxu0 0.0
  %1524 = vmatprep.subr.mxu0 0.0
  %1525 = vmatpush1.msra.mxu0 0.0
  %1526 = vmatprep.subr.mxu0 0.0
  %1527 = vmatpush1.msra.mxu0 0.0
  %1528 = vmatprep.subr.mxu0 0.0
  %1529 = vmatpush1.msra.mxu0 0.0
  %1530 = vmatprep.subr.mxu0 0.0
  %1531 = vmatpush1.msra.mxu0 0.0
  %1532 = vmatprep.subr.mxu0 0.0
  %1533 = vmatpush1.msra.mxu0 0.0
  %1534 = vmatprep.subr.mxu0 0.0
  %1535 = vmatpush1.msra.mxu0 0.0
  %1536 = vmatprep.subr.mxu0 0.0
  %1537 = vmatpush1.msra.mxu0 0.0
  %1538 = vmatprep.subr.mxu0 0.0
  %1539 = vmatpush1.msra.mxu0 0.0
  %1540 = vmatprep.subr.mxu0 0.0
  %1541 = vmatpush1.msra.mxu0 0.0
  %1542 = vmatprep.subr.mxu0 0.0
  %1543 = vmatpush1.msra.mxu0 0.0
  %1544 = vmatprep.subr.mxu0 0.0
  %1545 = vmatpush1.msra.mxu0 0.0
  %1546 = vmatprep.subr.mxu0 0.0
  %1547 = vmatpush1.msra.mxu0 0.0
  %1548 = vmatprep.subr.mxu0 0.0
  %1549 = vmatpush1.msra.mxu0 0.0
  %1550 = vmatprep.subr.mxu0 0.0
  %1551 = vmatpush1.msra.mxu0 0.0
  %1552 = vmatprep.subr.mxu0 0.0
  %1553 = vmatpush1.msra.mxu0 0.0
  %1554 = vmatprep.mubr.f32.mxu0 0.0
  %1555 = vmatmul.mubr.f32.gmra.mrb[0].mxu0 %v1417
  %v1556 = vpop.f32.mrb[0].mxu0
  %v1557 = vadd.f32 0.0, %v1556
  %v1558 = vpop.f32.mrb[0].mxu0
  %v1559 = vadd.f32 0.0, %v1558
  %1560 = vdwg.mxu0
  %1561 = vmatprep.subr.mxu0 %v226
  %1562 = vmatpush1.msra.mxu0 %v225
  %1563 = vmatprep.subr.mxu0 %v239
  %1564 = vmatpush1.msra.mxu0 %v238
  %1565 = vmatprep.subr.mxu0 %v252
  %1566 = vmatpush1.msra.mxu0 %v251
  %1567 = vmatprep.subr.mxu0 %v265
  %1568 = vmatpush1.msra.mxu0 %v264
  %1569 = vmatprep.subr.mxu0 %v278
  %1570 = vmatpush1.msra.mxu0 %v277
  %1571 = vmatprep.subr.mxu0 %v291
  %1572 = vmatpush1.msra.mxu0 %v290
  %1573 = vmatprep.subr.mxu0 %v304
  %1574 = vmatpush1.msra.mxu0 %v303
  %1575 = vmatprep.subr.mxu0 %v317
  %1576 = vmatpush1.msra.mxu0 %v316
  %1577 = vmatprep.subr.mxu0 0.0
  %1578 = vmatpush1.msra.mxu0 0.0
  %1579 = vmatprep.subr.mxu0 0.0
  %1580 = vmatpush1.msra.mxu0 0.0
  %1581 = vmatprep.subr.mxu0 0.0
  %1582 = vmatpush1.msra.mxu0 0.0
  %1583 = vmatprep.subr.mxu0 0.0
  %1584 = vmatpush1.msra.mxu0 0.0
  %1585 = vmatprep.subr.mxu0 0.0
  %1586 = vmatpush1.msra.mxu0 0.0
  %1587 = vmatprep.subr.mxu0 0.0
  %1588 = vmatpush1.msra.mxu0 0.0
  %1589 = vmatprep.subr.mxu0 0.0
  %1590 = vmatpush1.msra.mxu0 0.0
  %1591 = vmatprep.subr.mxu0 0.0
  %1592 = vmatpush1.msra.mxu0 0.0
  %1593 = vmatprep.subr.mxu0 0.0
  %1594 = vmatpush1.msra.mxu0 0.0
  %1595 = vmatprep.subr.mxu0 0.0
  %1596 = vmatpush1.msra.mxu0 0.0
  %1597 = vmatprep.subr.mxu0 0.0
  %1598 = vmatpush1.msra.mxu0 0.0
  %1599 = vmatprep.subr.mxu0 0.0
  %1600 = vmatpush1.msra.mxu0 0.0
  %1601 = vmatprep.subr.mxu0 0.0
  %1602 = vmatpush1.msra.mxu0 0.0
  %1603 = vmatprep.subr.mxu0 0.0
  %1604 = vmatpush1.msra.mxu0 0.0
  %1605 = vmatprep.subr.mxu0 0.0
  %1606 = vmatpush1.msra.mxu0 0.0
  %1607 = vmatprep.subr.mxu0 0.0
  %1608 = vmatpush1.msra.mxu0 0.0
  %1609 = vmatprep.subr.mxu0 0.0
  %1610 = vmatpush1.msra.mxu0 0.0
  %1611 = vmatprep.subr.mxu0 0.0
  %1612 = vmatpush1.msra.mxu0 0.0
  %1613 = vmatprep.subr.mxu0 0.0
  %1614 = vmatpush1.msra.mxu0 0.0
  %1615 = vmatprep.subr.mxu0 0.0
  %1616 = vmatpush1.msra.mxu0 0.0
  %1617 = vmatprep.subr.mxu0 0.0
  %1618 = vmatpush1.msra.mxu0 0.0
  %1619 = vmatprep.subr.mxu0 0.0
  %1620 = vmatpush1.msra.mxu0 0.0
  %1621 = vmatprep.subr.mxu0 0.0
  %1622 = vmatpush1.msra.mxu0 0.0
  %1623 = vmatprep.subr.mxu0 0.0
  %1624 = vmatpush1.msra.mxu0 0.0
  %1625 = vmatprep.mubr.f32.mxu0 0.0
  %1626 = vmatmul.mubr.f32.gmra.mrb[0].mxu0 %v1417
  %v1627 = vpop.f32.mrb[0].mxu0
  %v1628 = vadd.f32 0.0, %v1627
  %v1629 = vpop.f32.mrb[0].mxu0
  %v1630 = vadd.f32 0.0, %v1629
  %1631 = vdwg.mxu0
  %1632 = vmatprep.subr.mxu0 %v228
  %1633 = vmatpush1.msra.mxu0 %v227
  %1634 = vmatprep.subr.mxu0 %v241
  %1635 = vmatpush1.msra.mxu0 %v240
  %1636 = vmatprep.subr.mxu0 %v254
  %1637 = vmatpush1.msra.mxu0 %v253
  %1638 = vmatprep.subr.mxu0 %v267
  %1639 = vmatpush1.msra.mxu0 %v266
  %1640 = vmatprep.subr.mxu0 %v280
  %1641 = vmatpush1.msra.mxu0 %v279
  %1642 = vmatprep.subr.mxu0 %v293
  %1643 = vmatpush1.msra.mxu0 %v292
  %1644 = vmatprep.subr.mxu0 %v306
  %1645 = vmatpush1.msra.mxu0 %v305
  %1646 = vmatprep.subr.mxu0 %v319
  %1647 = vmatpush1.msra.mxu0 %v318
  %1648 = vmatprep.subr.mxu0 0.0
  %1649 = vmatpush1.msra.mxu0 0.0
  %1650 = vmatprep.subr.mxu0 0.0
  %1651 = vmatpush1.msra.mxu0 0.0
  %1652 = vmatprep.subr.mxu0 0.0
  %1653 = vmatpush1.msra.mxu0 0.0
  %1654 = vmatprep.subr.mxu0 0.0
  %1655 = vmatpush1.msra.mxu0 0.0
  %1656 = vmatprep.subr.mxu0 0.0
  %1657 = vmatpush1.msra.mxu0 0.0
  %1658 = vmatprep.subr.mxu0 0.0
  %1659 = vmatpush1.msra.mxu0 0.0
  %1660 = vmatprep.subr.mxu0 0.0
  %1661 = vmatpush1.msra.mxu0 0.0
  %1662 = vmatprep.subr.mxu0 0.0
  %1663 = vmatpush1.msra.mxu0 0.0
  %1664 = vmatprep.subr.mxu0 0.0
  %1665 = vmatpush1.msra.mxu0 0.0
  %1666 = vmatprep.subr.mxu0 0.0
  %1667 = vmatpush1.msra.mxu0 0.0
  %1668 = vmatprep.subr.mxu0 0.0
  %1669 = vmatpush1.msra.mxu0 0.0
  %1670 = vmatprep.subr.mxu0 0.0
  %1671 = vmatpush1.msra.mxu0 0.0
  %1672 = vmatprep.subr.mxu0 0.0
  %1673 = vmatpush1.msra.mxu0 0.0
  %1674 = vmatprep.subr.mxu0 0.0
  %1675 = vmatpush1.msra.mxu0 0.0
  %1676 = vmatprep.subr.mxu0 0.0
  %1677 = vmatpush1.msra.mxu0 0.0
  %1678 = vmatprep.subr.mxu0 0.0
  %1679 = vmatpush1.msra.mxu0 0.0
  %1680 = vmatprep.subr.mxu0 0.0
  %1681 = vmatpush1.msra.mxu0 0.0
  %1682 = vmatprep.subr.mxu0 0.0
  %1683 = vmatpush1.msra.mxu0 0.0
  %1684 = vmatprep.subr.mxu0 0.0
  %1685 = vmatpush1.msra.mxu0 0.0
  %1686 = vmatprep.subr.mxu0 0.0
  %1687 = vmatpush1.msra.mxu0 0.0
  %1688 = vmatprep.subr.mxu0 0.0
  %1689 = vmatpush1.msra.mxu0 0.0
  %1690 = vmatprep.subr.mxu0 0.0
  %1691 = vmatpush1.msra.mxu0 0.0
  %1692 = vmatprep.subr.mxu0 0.0
  %1693 = vmatpush1.msra.mxu0 0.0
  %1694 = vmatprep.subr.mxu0 0.0
  %1695 = vmatpush1.msra.mxu0 0.0
  %1696 = vmatprep.mubr.f32.mxu0 0.0
  %1697 = vmatmul.mubr.f32.gmra.mrb[0].mxu0 %v1417
  %v1698 = vpop.f32.mrb[0].mxu0
  %v1699 = vadd.f32 0.0, %v1698
  %v1700 = vpop.f32.mrb[0].mxu0
  %v1701 = vadd.f32 0.0, %v1700
  %1702 = vdwg.mxu0
  %1703 = vmatprep.subr.mxu0 %v230
  %1704 = vmatpush1.msra.mxu0 %v229
  %1705 = vmatprep.subr.mxu0 %v243
  %1706 = vmatpush1.msra.mxu0 %v242
  %1707 = vmatprep.subr.mxu0 %v256
  %1708 = vmatpush1.msra.mxu0 %v255
  %1709 = vmatprep.subr.mxu0 %v269
  %1710 = vmatpush1.msra.mxu0 %v268
  %1711 = vmatprep.subr.mxu0 %v282
  %1712 = vmatpush1.msra.mxu0 %v281
  %1713 = vmatprep.subr.mxu0 %v295
  %1714 = vmatpush1.msra.mxu0 %v294
  %1715 = vmatprep.subr.mxu0 %v308
  %1716 = vmatpush1.msra.mxu0 %v307
  %1717 = vmatprep.subr.mxu0 %v321
  %1718 = vmatpush1.msra.mxu0 %v320
  %1719 = vmatprep.subr.mxu0 0.0
  %1720 = vmatpush1.msra.mxu0 0.0
  %1721 = vmatprep.subr.mxu0 0.0
  %1722 = vmatpush1.msra.mxu0 0.0
  %1723 = vmatprep.subr.mxu0 0.0
  %1724 = vmatpush1.msra.mxu0 0.0
  %1725 = vmatprep.subr.mxu0 0.0
  %1726 = vmatpush1.msra.mxu0 0.0
  %1727 = vmatprep.subr.mxu0 0.0
  %1728 = vmatpush1.msra.mxu0 0.0
  %1729 = vmatprep.subr.mxu0 0.0
  %1730 = vmatpush1.msra.mxu0 0.0
  %1731 = vmatprep.subr.mxu0 0.0
  %1732 = vmatpush1.msra.mxu0 0.0
  %1733 = vmatprep.subr.mxu0 0.0
  %1734 = vmatpush1.msra.mxu0 0.0
  %1735 = vmatprep.subr.mxu0 0.0
  %1736 = vmatpush1.msra.mxu0 0.0
  %1737 = vmatprep.subr.mxu0 0.0
  %1738 = vmatpush1.msra.mxu0 0.0
  %1739 = vmatprep.subr.mxu0 0.0
  %1740 = vmatpush1.msra.mxu0 0.0
  %1741 = vmatprep.subr.mxu0 0.0
  %1742 = vmatpush1.msra.mxu0 0.0
  %1743 = vmatprep.subr.mxu0 0.0
  %1744 = vmatpush1.msra.mxu0 0.0
  %1745 = vmatprep.subr.mxu0 0.0
  %1746 = vmatpush1.msra.mxu0 0.0
  %1747 = vmatprep.subr.mxu0 0.0
  %1748 = vmatpush1.msra.mxu0 0.0
  %1749 = vmatprep.subr.mxu0 0.0
  %1750 = vmatpush1.msra.mxu0 0.0
  %1751 = vmatprep.subr.mxu0 0.0
  %1752 = vmatpush1.msra.mxu0 0.0
  %1753 = vmatprep.subr.mxu0 0.0
  %1754 = vmatpush1.msra.mxu0 0.0
  %1755 = vmatprep.subr.mxu0 0.0
  %1756 = vmatpush1.msra.mxu0 0.0
  %1757 = vmatprep.subr.mxu0 0.0
  %1758 = vmatpush1.msra.mxu0 0.0
  %1759 = vmatprep.subr.mxu0 0.0
  %1760 = vmatpush1.msra.mxu0 0.0
  %1761 = vmatprep.subr.mxu0 0.0
  %1762 = vmatpush1.msra.mxu0 0.0
  %1763 = vmatprep.subr.mxu0 0.0
  %1764 = vmatpush1.msra.mxu0 0.0
  %1765 = vmatprep.subr.mxu0 0.0
  %1766 = vmatpush1.msra.mxu0 0.0
  %1767 = vmatprep.mubr.f32.mxu0 0.0
  %1768 = vmatmul.mubr.f32.gmra.mrb[0].mxu0 %v1417
  %v1769 = vpop.f32.mrb[0].mxu0
  %v1770 = vadd.f32 0.0, %v1769
  %v1771 = vpop.f32.mrb[0].mxu0
  %v1772 = vadd.f32 0.0, %v1771
  %1773 = vdwg.mxu0
  %1774 = vmatprep.subr.mxu0 %v232
  %1775 = vmatpush1.msra.mxu0 %v231
  %1776 = vmatprep.subr.mxu0 %v245
  %1777 = vmatpush1.msra.mxu0 %v244
  %1778 = vmatprep.subr.mxu0 %v258
  %1779 = vmatpush1.msra.mxu0 %v257
  %1780 = vmatprep.subr.mxu0 %v271
  %1781 = vmatpush1.msra.mxu0 %v270
  %1782 = vmatprep.subr.mxu0 %v284
  %1783 = vmatpush1.msra.mxu0 %v283
  %1784 = vmatprep.subr.mxu0 %v297
  %1785 = vmatpush1.msra.mxu0 %v296
  %1786 = vmatprep.subr.mxu0 %v310
  %1787 = vmatpush1.msra.mxu0 %v309
  %1788 = vmatprep.subr.mxu0 %v323
  %1789 = vmatpush1.msra.mxu0 %v322
  %1790 = vmatprep.subr.mxu0 0.0
  %1791 = vmatpush1.msra.mxu0 0.0
  %1792 = vmatprep.subr.mxu0 0.0
  %1793 = vmatpush1.msra.mxu0 0.0
  %1794 = vmatprep.subr.mxu0 0.0
  %1795 = vmatpush1.msra.mxu0 0.0
  %1796 = vmatprep.subr.mxu0 0.0
  %1797 = vmatpush1.msra.mxu0 0.0
  %1798 = vmatprep.subr.mxu0 0.0
  %1799 = vmatpush1.msra.mxu0 0.0
  %1800 = vmatprep.subr.mxu0 0.0
  %1801 = vmatpush1.msra.mxu0 0.0
  %1802 = vmatprep.subr.mxu0 0.0
  %1803 = vmatpush1.msra.mxu0 0.0
  %1804 = vmatprep.subr.mxu0 0.0
  %1805 = vmatpush1.msra.mxu0 0.0
  %1806 = vmatprep.subr.mxu0 0.0
  %1807 = vmatpush1.msra.mxu0 0.0
  %1808 = vmatprep.subr.mxu0 0.0
  %1809 = vmatpush1.msra.mxu0 0.0
  %1810 = vmatprep.subr.mxu0 0.0
  %1811 = vmatpush1.msra.mxu0 0.0
  %1812 = vmatprep.subr.mxu0 0.0
  %1813 = vmatpush1.msra.mxu0 0.0
  %1814 = vmatprep.subr.mxu0 0.0
  %1815 = vmatpush1.msra.mxu0 0.0
  %1816 = vmatprep.subr.mxu0 0.0
  %1817 = vmatpush1.msra.mxu0 0.0
  %1818 = vmatprep.subr.mxu0 0.0
  %1819 = vmatpush1.msra.mxu0 0.0
  %1820 = vmatprep.subr.mxu0 0.0
  %1821 = vmatpush1.msra.mxu0 0.0
  %1822 = vmatprep.subr.mxu0 0.0
  %1823 = vmatpush1.msra.mxu0 0.0
  %1824 = vmatprep.subr.mxu0 0.0
  %1825 = vmatpush1.msra.mxu0 0.0
  %1826 = vmatprep.subr.mxu0 0.0
  %1827 = vmatpush1.msra.mxu0 0.0
  %1828 = vmatprep.subr.mxu0 0.0
  %1829 = vmatpush1.msra.mxu0 0.0
  %1830 = vmatprep.subr.mxu0 0.0
  %1831 = vmatpush1.msra.mxu0 0.0
  %1832 = vmatprep.subr.mxu0 0.0
  %1833 = vmatpush1.msra.mxu0 0.0
  %1834 = vmatprep.subr.mxu0 0.0
  %1835 = vmatpush1.msra.mxu0 0.0
  %1836 = vmatprep.subr.mxu0 0.0
  %1837 = vmatpush1.msra.mxu0 0.0
  %1838 = vmatprep.mubr.f32.mxu0 0.0
  %1839 = vmatmul.mubr.f32.gmra.mrb[0].mxu0 %v1417
  %v1840 = vpop.f32.mrb[0].mxu0
  %v1841 = vadd.f32 0.0, %v1840
  %v1842 = vpop.f32.mrb[0].mxu0
  %v1843 = vadd.f32 0.0, %v1842
  %1844 = vdwg.mxu0
  %1845 = vmatprep.subr.mxu0 0.0
  %1846 = vmatpush1.msra.mxu0 %v233
  %1847 = vmatprep.subr.mxu0 0.0
  %1848 = vmatpush1.msra.mxu0 %v246
  %1849 = vmatprep.subr.mxu0 0.0
  %1850 = vmatpush1.msra.mxu0 %v259
  %1851 = vmatprep.subr.mxu0 0.0
  %1852 = vmatpush1.msra.mxu0 %v272
  %1853 = vmatprep.subr.mxu0 0.0
  %1854 = vmatpush1.msra.mxu0 %v285
  %1855 = vmatprep.subr.mxu0 0.0
  %1856 = vmatpush1.msra.mxu0 %v298
  %1857 = vmatprep.subr.mxu0 0.0
  %1858 = vmatpush1.msra.mxu0 %v311
  %1859 = vmatprep.subr.mxu0 0.0
  %1860 = vmatpush1.msra.mxu0 %v324
  %1861 = vmatprep.subr.mxu0 0.0
  %1862 = vmatpush1.msra.mxu0 0.0
  %1863 = vmatprep.subr.mxu0 0.0
  %1864 = vmatpush1.msra.mxu0 0.0
  %1865 = vmatprep.subr.mxu0 0.0
  %1866 = vmatpush1.msra.mxu0 0.0
  %1867 = vmatprep.subr.mxu0 0.0
  %1868 = vmatpush1.msra.mxu0 0.0
  %1869 = vmatprep.subr.mxu0 0.0
  %1870 = vmatpush1.msra.mxu0 0.0
  %1871 = vmatprep.subr.mxu0 0.0
  %1872 = vmatpush1.msra.mxu0 0.0
  %1873 = vmatprep.subr.mxu0 0.0
  %1874 = vmatpush1.msra.mxu0 0.0
  %1875 = vmatprep.subr.mxu0 0.0
  %1876 = vmatpush1.msra.mxu0 0.0
  %1877 = vmatprep.subr.mxu0 0.0
  %1878 = vmatpush1.msra.mxu0 0.0
  %1879 = vmatprep.subr.mxu0 0.0
  %1880 = vmatpush1.msra.mxu0 0.0
  %1881 = vmatprep.subr.mxu0 0.0
  %1882 = vmatpush1.msra.mxu0 0.0
  %1883 = vmatprep.subr.mxu0 0.0
  %1884 = vmatpush1.msra.mxu0 0.0
  %1885 = vmatprep.subr.mxu0 0.0
  %1886 = vmatpush1.msra.mxu0 0.0
  %1887 = vmatprep.subr.mxu0 0.0
  %1888 = vmatpush1.msra.mxu0 0.0
  %1889 = vmatprep.subr.mxu0 0.0
  %1890 = vmatpush1.msra.mxu0 0.0
  %1891 = vmatprep.subr.mxu0 0.0
  %1892 = vmatpush1.msra.mxu0 0.0
  %1893 = vmatprep.subr.mxu0 0.0
  %1894 = vmatpush1.msra.mxu0 0.0
  %1895 = vmatprep.subr.mxu0 0.0
  %1896 = vmatpush1.msra.mxu0 0.0
  %1897 = vmatprep.subr.mxu0 0.0
  %1898 = vmatpush1.msra.mxu0 0.0
  %1899 = vmatprep.subr.mxu0 0.0
  %1900 = vmatpush1.msra.mxu0 0.0
  %1901 = vmatprep.subr.mxu0 0.0
  %1902 = vmatpush1.msra.mxu0 0.0
  %1903 = vmatprep.subr.mxu0 0.0
  %1904 = vmatpush1.msra.mxu0 0.0
  %1905 = vmatprep.subr.mxu0 0.0
  %1906 = vmatpush1.msra.mxu0 0.0
  %1907 = vmatprep.subr.mxu0 0.0
  %1908 = vmatpush1.msra.mxu0 0.0
  %1909 = vmatprep.mubr.f32.mxu0 0.0
  %1910 = vmatmul.mubr.f32.gmra.mrb[0].mxu0 %v1417
  %v1911 = vpop.f32.mrb[0].mxu0
  %v1912 = vadd.f32 0.0, %v1911
  %v1913 = vpop.f32.mrb[0].mxu0
  %1914 = vdwg.mxu0
  %v1916 = vsel %vm420, %v1414, 0
  %1918 = vmatprep.subr.mxu0 %v222
  %1919 = vmatpush1.msra.mxu0 %v221
  %1920 = vmatprep.subr.mxu0 %v235
  %1921 = vmatpush1.msra.mxu0 %v234
  %1922 = vmatprep.subr.mxu0 %v248
  %1923 = vmatpush1.msra.mxu0 %v247
  %1924 = vmatprep.subr.mxu0 %v261
  %1925 = vmatpush1.msra.mxu0 %v260
  %1926 = vmatprep.subr.mxu0 %v274
  %1927 = vmatpush1.msra.mxu0 %v273
  %1928 = vmatprep.subr.mxu0 %v287
  %1929 = vmatpush1.msra.mxu0 %v286
  %1930 = vmatprep.subr.mxu0 %v300
  %1931 = vmatpush1.msra.mxu0 %v299
  %1932 = vmatprep.subr.mxu0 %v313
  %1933 = vmatpush1.msra.mxu0 %v312
  %1934 = vmatprep.subr.mxu0 0.0
  %1935 = vmatpush1.msra.mxu0 0.0
  %1936 = vmatprep.subr.mxu0 0.0
  %1937 = vmatpush1.msra.mxu0 0.0
  %1938 = vmatprep.subr.mxu0 0.0
  %1939 = vmatpush1.msra.mxu0 0.0
  %1940 = vmatprep.subr.mxu0 0.0
  %1941 = vmatpush1.msra.mxu0 0.0
  %1942 = vmatprep.subr.mxu0 0.0
  %1943 = vmatpush1.msra.mxu0 0.0
  %1944 = vmatprep.subr.mxu0 0.0
  %1945 = vmatpush1.msra.mxu0 0.0
  %1946 = vmatprep.subr.mxu0 0.0
  %1947 = vmatpush1.msra.mxu0 0.0
  %1948 = vmatprep.subr.mxu0 0.0
  %1949 = vmatpush1.msra.mxu0 0.0
  %1950 = vmatprep.subr.mxu0 0.0
  %1951 = vmatpush1.msra.mxu0 0.0
  %1952 = vmatprep.subr.mxu0 0.0
  %1953 = vmatpush1.msra.mxu0 0.0
  %1954 = vmatprep.subr.mxu0 0.0
  %1955 = vmatpush1.msra.mxu0 0.0
  %1956 = vmatprep.subr.mxu0 0.0
  %1957 = vmatpush1.msra.mxu0 0.0
  %1958 = vmatprep.subr.mxu0 0.0
  %1959 = vmatpush1.msra.mxu0 0.0
  %1960 = vmatprep.subr.mxu0 0.0
  %1961 = vmatpush1.msra.mxu0 0.0
  %1962 = vmatprep.subr.mxu0 0.0
  %1963 = vmatpush1.msra.mxu0 0.0
  %1964 = vmatprep.subr.mxu0 0.0
  %1965 = vmatpush1.msra.mxu0 0.0
  %1966 = vmatprep.subr.mxu0 0.0
  %1967 = vmatpush1.msra.mxu0 0.0
  %1968 = vmatprep.subr.mxu0 0.0
  %1969 = vmatpush1.msra.mxu0 0.0
  %1970 = vmatprep.subr.mxu0 0.0
  %1971 = vmatpush1.msra.mxu0 0.0
  %1972 = vmatprep.subr.mxu0 0.0
  %1973 = vmatpush1.msra.mxu0 0.0
  %1974 = vmatprep.subr.mxu0 0.0
  %1975 = vmatpush1.msra.mxu0 0.0
  %1976 = vmatprep.subr.mxu0 0.0
  %1977 = vmatpush1.msra.mxu0 0.0
  %1978 = vmatprep.subr.mxu0 0.0
  %1979 = vmatpush1.msra.mxu0 0.0
  %1980 = vmatprep.subr.mxu0 0.0
  %1981 = vmatpush1.msra.mxu0 0.0
  %1982 = vmatprep.mubr.f32.mxu0 0.0
  %1983 = vmatmul.mubr.f32.gmra.mrb[0].mxu0 %v1916
  %v1984 = vpop.f32.mrb[0].mxu0
  %v1985 = vadd.f32 %v1486, %v1984
  %v1986 = vpop.f32.mrb[0].mxu0
  %v1987 = vadd.f32 %v1488, %v1986
  %1988 = vdwg.mxu0
  %1989 = vmatprep.subr.mxu0 %v224
  %1990 = vmatpush1.msra.mxu0 %v223
  %1991 = vmatprep.subr.mxu0 %v237
  %1992 = vmatpush1.msra.mxu0 %v236
  %1993 = vmatprep.subr.mxu0 %v250
  %1994 = vmatpush1.msra.mxu0 %v249
  %1995 = vmatprep.subr.mxu0 %v263
  %1996 = vmatpush1.msra.mxu0 %v262
  %1997 = vmatprep.subr.mxu0 %v276
  %1998 = vmatpush1.msra.mxu0 %v275
  %1999 = vmatprep.subr.mxu0 %v289
  %2000 = vmatpush1.msra.mxu0 %v288
  %2001 = vmatprep.subr.mxu0 %v302
  %2002 = vmatpush1.msra.mxu0 %v301
  %2003 = vmatprep.subr.mxu0 %v315
  %2004 = vmatpush1.msra.mxu0 %v314
  %2005 = vmatprep.subr.mxu0 0.0
  %2006 = vmatpush1.msra.mxu0 0.0
  %2007 = vmatprep.subr.mxu0 0.0
  %2008 = vmatpush1.msra.mxu0 0.0
  %2009 = vmatprep.subr.mxu0 0.0
  %2010 = vmatpush1.msra.mxu0 0.0
  %2011 = vmatprep.subr.mxu0 0.0
  %2012 = vmatpush1.msra.mxu0 0.0
  %2013 = vmatprep.subr.mxu0 0.0
  %2014 = vmatpush1.msra.mxu0 0.0
  %2015 = vmatprep.subr.mxu0 0.0
  %2016 = vmatpush1.msra.mxu0 0.0
  %2017 = vmatprep.subr.mxu0 0.0
  %2018 = vmatpush1.msra.mxu0 0.0
  %2019 = vmatprep.subr.mxu0 0.0
  %2020 = vmatpush1.msra.mxu0 0.0
  %2021 = vmatprep.subr.mxu0 0.0
  %2022 = vmatpush1.msra.mxu0 0.0
  %2023 = vmatprep.subr.mxu0 0.0
  %2024 = vmatpush1.msra.mxu0 0.0
  %2025 = vmatprep.subr.mxu0 0.0
  %2026 = vmatpush1.msra.mxu0 0.0
  %2027 = vmatprep.subr.mxu0 0.0
  %2028 = vmatpush1.msra.mxu0 0.0
  %2029 = vmatprep.subr.mxu0 0.0
  %2030 = vmatpush1.msra.mxu0 0.0
  %2031 = vmatprep.subr.mxu0 0.0
  %2032 = vmatpush1.msra.mxu0 0.0
  %2033 = vmatprep.subr.mxu0 0.0
  %2034 = vmatpush1.msra.mxu0 0.0
  %2035 = vmatprep.subr.mxu0 0.0
  %2036 = vmatpush1.msra.mxu0 0.0
  %2037 = vmatprep.subr.mxu0 0.0
  %2038 = vmatpush1.msra.mxu0 0.0
  %2039 = vmatprep.subr.mxu0 0.0
  %2040 = vmatpush1.msra.mxu0 0.0
  %2041 = vmatprep.subr.mxu0 0.0
  %2042 = vmatpush1.msra.mxu0 0.0
  %2043 = vmatprep.subr.mxu0 0.0
  %2044 = vmatpush1.msra.mxu0 0.0
  %2045 = vmatprep.subr.mxu0 0.0
  %2046 = vmatpush1.msra.mxu0 0.0
  %2047 = vmatprep.subr.mxu0 0.0
  %2048 = vmatpush1.msra.mxu0 0.0
  %2049 = vmatprep.subr.mxu0 0.0
  %2050 = vmatpush1.msra.mxu0 0.0
  %2051 = vmatprep.subr.mxu0 0.0
  %2052 = vmatpush1.msra.mxu0 0.0
  %2053 = vmatprep.mubr.f32.mxu0 0.0
  %2054 = vmatmul.mubr.f32.gmra.mrb[0].mxu0 %v1916
  %v2055 = vpop.f32.mrb[0].mxu0
  %v2056 = vadd.f32 %v1557, %v2055
  %v2057 = vpop.f32.mrb[0].mxu0
  %v2058 = vadd.f32 %v1559, %v2057
  %2059 = vdwg.mxu0
  %2060 = vmatprep.subr.mxu0 %v226
  %2061 = vmatpush1.msra.mxu0 %v225
  %2062 = vmatprep.subr.mxu0 %v239
  %2063 = vmatpush1.msra.mxu0 %v238
  %2064 = vmatprep.subr.mxu0 %v252
  %2065 = vmatpush1.msra.mxu0 %v251
  %2066 = vmatprep.subr.mxu0 %v265
  %2067 = vmatpush1.msra.mxu0 %v264
  %2068 = vmatprep.subr.mxu0 %v278
  %2069 = vmatpush1.msra.mxu0 %v277
  %2070 = vmatprep.subr.mxu0 %v291
  %2071 = vmatpush1.msra.mxu0 %v290
  %2072 = vmatprep.subr.mxu0 %v304
  %2073 = vmatpush1.msra.mxu0 %v303
  %2074 = vmatprep.subr.mxu0 %v317
  %2075 = vmatpush1.msra.mxu0 %v316
  %2076 = vmatprep.subr.mxu0 0.0
  %2077 = vmatpush1.msra.mxu0 0.0
  %2078 = vmatprep.subr.mxu0 0.0
  %2079 = vmatpush1.msra.mxu0 0.0
  %2080 = vmatprep.subr.mxu0 0.0
  %2081 = vmatpush1.msra.mxu0 0.0
  %2082 = vmatprep.subr.mxu0 0.0
  %2083 = vmatpush1.msra.mxu0 0.0
  %2084 = vmatprep.subr.mxu0 0.0
  %2085 = vmatpush1.msra.mxu0 0.0
  %2086 = vmatprep.subr.mxu0 0.0
  %2087 = vmatpush1.msra.mxu0 0.0
  %2088 = vmatprep.subr.mxu0 0.0
  %2089 = vmatpush1.msra.mxu0 0.0
  %2090 = vmatprep.subr.mxu0 0.0
  %2091 = vmatpush1.msra.mxu0 0.0
  %2092 = vmatprep.subr.mxu0 0.0
  %2093 = vmatpush1.msra.mxu0 0.0
  %2094 = vmatprep.subr.mxu0 0.0
  %2095 = vmatpush1.msra.mxu0 0.0
  %2096 = vmatprep.subr.mxu0 0.0
  %2097 = vmatpush1.msra.mxu0 0.0
  %2098 = vmatprep.subr.mxu0 0.0
  %2099 = vmatpush1.msra.mxu0 0.0
  %2100 = vmatprep.subr.mxu0 0.0
  %2101 = vmatpush1.msra.mxu0 0.0
  %2102 = vmatprep.subr.mxu0 0.0
  %2103 = vmatpush1.msra.mxu0 0.0
  %2104 = vmatprep.subr.mxu0 0.0
  %2105 = vmatpush1.msra.mxu0 0.0
  %2106 = vmatprep.subr.mxu0 0.0
  %2107 = vmatpush1.msra.mxu0 0.0
  %2108 = vmatprep.subr.mxu0 0.0
  %2109 = vmatpush1.msra.mxu0 0.0
  %2110 = vmatprep.subr.mxu0 0.0
  %2111 = vmatpush1.msra.mxu0 0.0
  %2112 = vmatprep.subr.mxu0 0.0
  %2113 = vmatpush1.msra.mxu0 0.0
  %2114 = vmatprep.subr.mxu0 0.0
  %2115 = vmatpush1.msra.mxu0 0.0
  %2116 = vmatprep.subr.mxu0 0.0
  %2117 = vmatpush1.msra.mxu0 0.0
  %2118 = vmatprep.subr.mxu0 0.0
  %2119 = vmatpush1.msra.mxu0 0.0
  %2120 = vmatprep.subr.mxu0 0.0
  %2121 = vmatpush1.msra.mxu0 0.0
  %2122 = vmatprep.subr.mxu0 0.0
  %2123 = vmatpush1.msra.mxu0 0.0
  %2124 = vmatprep.mubr.f32.mxu0 0.0
  %2125 = vmatmul.mubr.f32.gmra.mrb[0].mxu0 %v1916
  %v2126 = vpop.f32.mrb[0].mxu0
  %v2127 = vadd.f32 %v1628, %v2126
  %v2128 = vpop.f32.mrb[0].mxu0
  %v2129 = vadd.f32 %v1630, %v2128
  %2130 = vdwg.mxu0
  %2131 = vmatprep.subr.mxu0 %v228
  %2132 = vmatpush1.msra.mxu0 %v227
  %2133 = vmatprep.subr.mxu0 %v241
  %2134 = vmatpush1.msra.mxu0 %v240
  %2135 = vmatprep.subr.mxu0 %v254
  %2136 = vmatpush1.msra.mxu0 %v253
  %2137 = vmatprep.subr.mxu0 %v267
  %2138 = vmatpush1.msra.mxu0 %v266
  %2139 = vmatprep.subr.mxu0 %v280
  %2140 = vmatpush1.msra.mxu0 %v279
  %2141 = vmatprep.subr.mxu0 %v293
  %2142 = vmatpush1.msra.mxu0 %v292
  %2143 = vmatprep.subr.mxu0 %v306
  %2144 = vmatpush1.msra.mxu0 %v305
  %2145 = vmatprep.subr.mxu0 %v319
  %2146 = vmatpush1.msra.mxu0 %v318
  %2147 = vmatprep.subr.mxu0 0.0
  %2148 = vmatpush1.msra.mxu0 0.0
  %2149 = vmatprep.subr.mxu0 0.0
  %2150 = vmatpush1.msra.mxu0 0.0
  %2151 = vmatprep.subr.mxu0 0.0
  %2152 = vmatpush1.msra.mxu0 0.0
  %2153 = vmatprep.subr.mxu0 0.0
  %2154 = vmatpush1.msra.mxu0 0.0
  %2155 = vmatprep.subr.mxu0 0.0
  %2156 = vmatpush1.msra.mxu0 0.0
  %2157 = vmatprep.subr.mxu0 0.0
  %2158 = vmatpush1.msra.mxu0 0.0
  %2159 = vmatprep.subr.mxu0 0.0
  %2160 = vmatpush1.msra.mxu0 0.0
  %2161 = vmatprep.subr.mxu0 0.0
  %2162 = vmatpush1.msra.mxu0 0.0
  %2163 = vmatprep.subr.mxu0 0.0
  %2164 = vmatpush1.msra.mxu0 0.0
  %2165 = vmatprep.subr.mxu0 0.0
  %2166 = vmatpush1.msra.mxu0 0.0
  %2167 = vmatprep.subr.mxu0 0.0
  %2168 = vmatpush1.msra.mxu0 0.0
  %2169 = vmatprep.subr.mxu0 0.0
  %2170 = vmatpush1.msra.mxu0 0.0
  %2171 = vmatprep.subr.mxu0 0.0
  %2172 = vmatpush1.msra.mxu0 0.0
  %2173 = vmatprep.subr.mxu0 0.0
  %2174 = vmatpush1.msra.mxu0 0.0
  %2175 = vmatprep.subr.mxu0 0.0
  %2176 = vmatpush1.msra.mxu0 0.0
  %2177 = vmatprep.subr.mxu0 0.0
  %2178 = vmatpush1.msra.mxu0 0.0
  %2179 = vmatprep.subr.mxu0 0.0
  %2180 = vmatpush1.msra.mxu0 0.0
  %2181 = vmatprep.subr.mxu0 0.0
  %2182 = vmatpush1.msra.mxu0 0.0
  %2183 = vmatprep.subr.mxu0 0.0
  %2184 = vmatpush1.msra.mxu0 0.0
  %2185 = vmatprep.subr.mxu0 0.0
  %2186 = vmatpush1.msra.mxu0 0.0
  %2187 = vmatprep.subr.mxu0 0.0
  %2188 = vmatpush1.msra.mxu0 0.0
  %2189 = vmatprep.subr.mxu0 0.0
  %2190 = vmatpush1.msra.mxu0 0.0
  %2191 = vmatprep.subr.mxu0 0.0
  %2192 = vmatpush1.msra.mxu0 0.0
  %2193 = vmatprep.subr.mxu0 0.0
  %2194 = vmatpush1.msra.mxu0 0.0
  %2195 = vmatprep.mubr.f32.mxu0 0.0
  %2196 = vmatmul.mubr.f32.gmra.mrb[0].mxu0 %v1916
  %v2197 = vpop.f32.mrb[0].mxu0
  %v2198 = vadd.f32 %v1699, %v2197
  %v2199 = vpop.f32.mrb[0].mxu0
  %v2200 = vadd.f32 %v1701, %v2199
  %2201 = vdwg.mxu0
  %2202 = vmatprep.subr.mxu0 %v230
  %2203 = vmatpush1.msra.mxu0 %v229
  %2204 = vmatprep.subr.mxu0 %v243
  %2205 = vmatpush1.msra.mxu0 %v242
  %2206 = vmatprep.subr.mxu0 %v256
  %2207 = vmatpush1.msra.mxu0 %v255
  %2208 = vmatprep.subr.mxu0 %v269
  %2209 = vmatpush1.msra.mxu0 %v268
  %2210 = vmatprep.subr.mxu0 %v282
  %2211 = vmatpush1.msra.mxu0 %v281
  %2212 = vmatprep.subr.mxu0 %v295
  %2213 = vmatpush1.msra.mxu0 %v294
  %2214 = vmatprep.subr.mxu0 %v308
  %2215 = vmatpush1.msra.mxu0 %v307
  %2216 = vmatprep.subr.mxu0 %v321
  %2217 = vmatpush1.msra.mxu0 %v320
  %2218 = vmatprep.subr.mxu0 0.0
  %2219 = vmatpush1.msra.mxu0 0.0
  %2220 = vmatprep.subr.mxu0 0.0
  %2221 = vmatpush1.msra.mxu0 0.0
  %2222 = vmatprep.subr.mxu0 0.0
  %2223 = vmatpush1.msra.mxu0 0.0
  %2224 = vmatprep.subr.mxu0 0.0
  %2225 = vmatpush1.msra.mxu0 0.0
  %2226 = vmatprep.subr.mxu0 0.0
  %2227 = vmatpush1.msra.mxu0 0.0
  %2228 = vmatprep.subr.mxu0 0.0
  %2229 = vmatpush1.msra.mxu0 0.0
  %2230 = vmatprep.subr.mxu0 0.0
  %2231 = vmatpush1.msra.mxu0 0.0
  %2232 = vmatprep.subr.mxu0 0.0
  %2233 = vmatpush1.msra.mxu0 0.0
  %2234 = vmatprep.subr.mxu0 0.0
  %2235 = vmatpush1.msra.mxu0 0.0
  %2236 = vmatprep.subr.mxu0 0.0
  %2237 = vmatpush1.msra.mxu0 0.0
  %2238 = vmatprep.subr.mxu0 0.0
  %2239 = vmatpush1.msra.mxu0 0.0
  %2240 = vmatprep.subr.mxu0 0.0
  %2241 = vmatpush1.msra.mxu0 0.0
  %2242 = vmatprep.subr.mxu0 0.0
  %2243 = vmatpush1.msra.mxu0 0.0
  %2244 = vmatprep.subr.mxu0 0.0
  %2245 = vmatpush1.msra.mxu0 0.0
  %2246 = vmatprep.subr.mxu0 0.0
  %2247 = vmatpush1.msra.mxu0 0.0
  %2248 = vmatprep.subr.mxu0 0.0
  %2249 = vmatpush1.msra.mxu0 0.0
  %2250 = vmatprep.subr.mxu0 0.0
  %2251 = vmatpush1.msra.mxu0 0.0
  %2252 = vmatprep.subr.mxu0 0.0
  %2253 = vmatpush1.msra.mxu0 0.0
  %2254 = vmatprep.subr.mxu0 0.0
  %2255 = vmatpush1.msra.mxu0 0.0
  %2256 = vmatprep.subr.mxu0 0.0
  %2257 = vmatpush1.msra.mxu0 0.0
  %2258 = vmatprep.subr.mxu0 0.0
  %2259 = vmatpush1.msra.mxu0 0.0
  %2260 = vmatprep.subr.mxu0 0.0
  %2261 = vmatpush1.msra.mxu0 0.0
  %2262 = vmatprep.subr.mxu0 0.0
  %2263 = vmatpush1.msra.mxu0 0.0
  %2264 = vmatprep.subr.mxu0 0.0
  %2265 = vmatpush1.msra.mxu0 0.0
  %2266 = vmatprep.mubr.f32.mxu0 0.0
  %2267 = vmatmul.mubr.f32.gmra.mrb[0].mxu0 %v1916
  %v2268 = vpop.f32.mrb[0].mxu0
  %v2269 = vadd.f32 %v1770, %v2268
  %v2270 = vpop.f32.mrb[0].mxu0
  %v2271 = vadd.f32 %v1772, %v2270
  %2272 = vdwg.mxu0
  %2273 = vmatprep.subr.mxu0 %v232
  %2274 = vmatpush1.msra.mxu0 %v231
  %2275 = vmatprep.subr.mxu0 %v245
  %2276 = vmatpush1.msra.mxu0 %v244
  %2277 = vmatprep.subr.mxu0 %v258
  %2278 = vmatpush1.msra.mxu0 %v257
  %2279 = vmatprep.subr.mxu0 %v271
  %2280 = vmatpush1.msra.mxu0 %v270
  %2281 = vmatprep.subr.mxu0 %v284
  %2282 = vmatpush1.msra.mxu0 %v283
  %2283 = vmatprep.subr.mxu0 %v297
  %2284 = vmatpush1.msra.mxu0 %v296
  %2285 = vmatprep.subr.mxu0 %v310
  %2286 = vmatpush1.msra.mxu0 %v309
  %2287 = vmatprep.subr.mxu0 %v323
  %2288 = vmatpush1.msra.mxu0 %v322
  %2289 = vmatprep.subr.mxu0 0.0
  %2290 = vmatpush1.msra.mxu0 0.0
  %2291 = vmatprep.subr.mxu0 0.0
  %2292 = vmatpush1.msra.mxu0 0.0
  %2293 = vmatprep.subr.mxu0 0.0
  %2294 = vmatpush1.msra.mxu0 0.0
  %2295 = vmatprep.subr.mxu0 0.0
  %2296 = vmatpush1.msra.mxu0 0.0
  %2297 = vmatprep.subr.mxu0 0.0
  %2298 = vmatpush1.msra.mxu0 0.0
  %2299 = vmatprep.subr.mxu0 0.0
  %2300 = vmatpush1.msra.mxu0 0.0
  %2301 = vmatprep.subr.mxu0 0.0
  %2302 = vmatpush1.msra.mxu0 0.0
  %2303 = vmatprep.subr.mxu0 0.0
  %2304 = vmatpush1.msra.mxu0 0.0
  %2305 = vmatprep.subr.mxu0 0.0
  %2306 = vmatpush1.msra.mxu0 0.0
  %2307 = vmatprep.subr.mxu0 0.0
  %2308 = vmatpush1.msra.mxu0 0.0
  %2309 = vmatprep.subr.mxu0 0.0
  %2310 = vmatpush1.msra.mxu0 0.0
  %2311 = vmatprep.subr.mxu0 0.0
  %2312 = vmatpush1.msra.mxu0 0.0
  %2313 = vmatprep.subr.mxu0 0.0
  %2314 = vmatpush1.msra.mxu0 0.0
  %2315 = vmatprep.subr.mxu0 0.0
  %2316 = vmatpush1.msra.mxu0 0.0
  %2317 = vmatprep.subr.mxu0 0.0
  %2318 = vmatpush1.msra.mxu0 0.0
  %2319 = vmatprep.subr.mxu0 0.0
  %2320 = vmatpush1.msra.mxu0 0.0
  %2321 = vmatprep.subr.mxu0 0.0
  %2322 = vmatpush1.msra.mxu0 0.0
  %2323 = vmatprep.subr.mxu0 0.0
  %2324 = vmatpush1.msra.mxu0 0.0
  %2325 = vmatprep.subr.mxu0 0.0
  %2326 = vmatpush1.msra.mxu0 0.0
  %2327 = vmatprep.subr.mxu0 0.0
  %2328 = vmatpush1.msra.mxu0 0.0
  %2329 = vmatprep.subr.mxu0 0.0
  %2330 = vmatpush1.msra.mxu0 0.0
  %2331 = vmatprep.subr.mxu0 0.0
  %2332 = vmatpush1.msra.mxu0 0.0
  %2333 = vmatprep.subr.mxu0 0.0
  %2334 = vmatpush1.msra.mxu0 0.0
  %2335 = vmatprep.subr.mxu0 0.0
  %2336 = vmatpush1.msra.mxu0 0.0
  %2337 = vmatprep.mubr.f32.mxu0 0.0
  %2338 = vmatmul.mubr.f32.gmra.mrb[0].mxu0 %v1916
  %v2339 = vpop.f32.mrb[0].mxu0
  %v2340 = vadd.f32 %v1841, %v2339
  %v2341 = vpop.f32.mrb[0].mxu0
  %v2342 = vadd.f32 %v1843, %v2341
  %2343 = vdwg.mxu0
  %2344 = vmatprep.subr.mxu0 0.0
  %2345 = vmatpush1.msra.mxu0 %v233
  %2346 = vmatprep.subr.mxu0 0.0
  %2347 = vmatpush1.msra.mxu0 %v246
  %2348 = vmatprep.subr.mxu0 0.0
  %2349 = vmatpush1.msra.mxu0 %v259
  %2350 = vmatprep.subr.mxu0 0.0
  %2351 = vmatpush1.msra.mxu0 %v272
  %2352 = vmatprep.subr.mxu0 0.0
  %2353 = vmatpush1.msra.mxu0 %v285
  %2354 = vmatprep.subr.mxu0 0.0
  %2355 = vmatpush1.msra.mxu0 %v298
  %2356 = vmatprep.subr.mxu0 0.0
  %2357 = vmatpush1.msra.mxu0 %v311
  %2358 = vmatprep.subr.mxu0 0.0
  %2359 = vmatpush1.msra.mxu0 %v324
  %2360 = vmatprep.subr.mxu0 0.0
  %2361 = vmatpush1.msra.mxu0 0.0
  %2362 = vmatprep.subr.mxu0 0.0
  %2363 = vmatpush1.msra.mxu0 0.0
  %2364 = vmatprep.subr.mxu0 0.0
  %2365 = vmatpush1.msra.mxu0 0.0
  %2366 = vmatprep.subr.mxu0 0.0
  %2367 = vmatpush1.msra.mxu0 0.0
  %2368 = vmatprep.subr.mxu0 0.0
  %2369 = vmatpush1.msra.mxu0 0.0
  %2370 = vmatprep.subr.mxu0 0.0
  %2371 = vmatpush1.msra.mxu0 0.0
  %2372 = vmatprep.subr.mxu0 0.0
  %2373 = vmatpush1.msra.mxu0 0.0
  %2374 = vmatprep.subr.mxu0 0.0
  %2375 = vmatpush1.msra.mxu0 0.0
  %2376 = vmatprep.subr.mxu0 0.0
  %2377 = vmatpush1.msra.mxu0 0.0
  %2378 = vmatprep.subr.mxu0 0.0
  %2379 = vmatpush1.msra.mxu0 0.0
  %2380 = vmatprep.subr.mxu0 0.0
  %2381 = vmatpush1.msra.mxu0 0.0
  %2382 = vmatprep.subr.mxu0 0.0
  %2383 = vmatpush1.msra.mxu0 0.0
  %2384 = vmatprep.subr.mxu0 0.0
  %2385 = vmatpush1.msra.mxu0 0.0
  %2386 = vmatprep.subr.mxu0 0.0
  %2387 = vmatpush1.msra.mxu0 0.0
  %2388 = vmatprep.subr.mxu0 0.0
  %2389 = vmatpush1.msra.mxu0 0.0
  %2390 = vmatprep.subr.mxu0 0.0
  %2391 = vmatpush1.msra.mxu0 0.0
  %2392 = vmatprep.subr.mxu0 0.0
  %2393 = vmatpush1.msra.mxu0 0.0
  %2394 = vmatprep.subr.mxu0 0.0
  %2395 = vmatpush1.msra.mxu0 0.0
  %2396 = vmatprep.subr.mxu0 0.0
  %2397 = vmatpush1.msra.mxu0 0.0
  %2398 = vmatprep.subr.mxu0 0.0
  %2399 = vmatpush1.msra.mxu0 0.0
  %2400 = vmatprep.subr.mxu0 0.0
  %2401 = vmatpush1.msra.mxu0 0.0
  %2402 = vmatprep.subr.mxu0 0.0
  %2403 = vmatpush1.msra.mxu0 0.0
  %2404 = vmatprep.subr.mxu0 0.0
  %2405 = vmatpush1.msra.mxu0 0.0
  %2406 = vmatprep.subr.mxu0 0.0
  %2407 = vmatpush1.msra.mxu0 0.0
  %2408 = vmatprep.mubr.f32.mxu0 0.0
  %2409 = vmatmul.mubr.f32.gmra.mrb[0].mxu0 %v1916
  %v2410 = vpop.f32.mrb[0].mxu0
  %v2411 = vadd.f32 %v1912, %v2410
  %v2412 = vpop.f32.mrb[0].mxu0
  %2413 = vdwg.mxu0
  %v2426 = vcombine.low %v1985, %v1987
  %v2427 = vcombine.low %v2056, %v2058
  %v2428 = vcombine.low %v2127, %v2129
  %v2429 = vcombine.low %v2198, %v2200
  %v2430 = vcombine.low %v2269, %v2271
  %v2431 = vcombine.low %v2340, %v2342
  %v2438 = vmul.f32 %v14, %v2426
  %v2439 = vmul.f32 %v15, %v2427
  %v2440 = vmul.f32 %v16, %v2428
  %v2441 = vmul.f32 %v17, %v2429
  %v2442 = vmul.f32 %v18, %v2430
  %v2443 = vmul.f32 %v19, %v2431
  %v2444 = vmul.f32 %v20, %v2411
  %2445 = vst [vmem:[%s3] sm:$0xff] %v2438
  %2446 = vst [vmem:[%s3 + $0x8] sm:$0xff] %v2439
  %2447 = vst [vmem:[%s3 + $0x10] sm:$0xff] %v2440
  %2448 = vst [vmem:[%s3 + $0x18] sm:$0xff] %v2441
  %2449 = vst [vmem:[%s3 + $0x20] sm:$0xff] %v2442
  %2450 = vst [vmem:[%s3 + $0x28] sm:$0xff] %v2443
  %vm2451 = vcmask 519168
  %2452 = vst.msk [vmem:[%s3 + $0x30] sm:$0xf] %vm2451, %v2444
  // Predicated region
  $region14: #{model_forward.1} parent=0 // pred_check
    _
  $region15: #{model_forward.1} parent=0 // pred_check_branch
    %2454 = sbr.rel (0) target = $region17
  $region16: #{model_forward.1} parent=0 // pred_region
    _
  $region17: #{model_forward.1} parent=0 // pred_fallthru
    _
  // Predicated region
  $region18: #{model_forward.1} parent=0 // pred_check
    _
  $region19: #{model_forward.1} parent=0 // pred_check_branch
    %2456 = sbr.rel (0) target = $region21
  $region20: #{model_forward.1} parent=0 // pred_region
    _
  $region21: #{model_forward.1} parent=0 // pred_fallthru
    _

</llo_original>
